<compile_context>
chip_gen: v5e
topology: v5e:2x2
jax: 0.10.0
libtpu: 0.0.40
codegen_flags: <defaults>
</compile_context>

<pallas_src>
import math
import numpy as np
import jax
import jax.numpy as jnp
from jax.experimental import pallas as pl
from jax.experimental.pallas import tpu as pltpu

# ----------------------------------------------------------------------------
# Model hyper-parameters (small, consistent with the module's __init__)
# ----------------------------------------------------------------------------
B = 2          # batch_size
S = 8          # seq_len
D_MODEL = 32   # d_model
N_HEADS = 4    # n_heads
D_K = D_MODEL // N_HEADS
D_V = D_MODEL // N_HEADS
TEMPORAL_DECAY = 0.9
VALIDATION_WEIGHT = 0.1
SCALE = 1.0 / math.sqrt(D_K)
D_HID = D_MODEL // 2   # confidence network hidden size


# ----------------------------------------------------------------------------
# Pallas kernel: whole batch in a single invocation.
# ----------------------------------------------------------------------------
def temporal_attention_kernel(q_ref, k_ref, v_ref, t_ref,
                              wqc_ref, bqc_ref, wk_ref, bk_ref,
                              wv_ref, bv_ref, wo_ref, bo_ref,
                              wc2_ref, bc2_ref,
                              out_ref, attn_ref):
    # ---- fold batch into the row (sublane) dimension for the projections ----
    q2 = q_ref[...].reshape(B * S, D_MODEL)        # (16, 32)
    k2 = k_ref[...].reshape(B * S, D_MODEL)
    v2 = v_ref[...].reshape(B * S, D_MODEL)

    # Fused q-side projection: [W_q * SCALE | W_c1]  -> one MXU matmul.
    qh = jnp.dot(q2, wqc_ref[...], preferred_element_type=jnp.float32) + bqc_ref[...]
    Q = qh[:, :D_MODEL]                             # (16, 32), already scaled
    h = jnp.maximum(qh[:, D_MODEL:], 0.0)           # (16, D_HID)

    # Validation confidence: sigmoid(W2 @ relu(...))
    conf = jax.nn.sigmoid(
        jnp.dot(h, wc2_ref[...], preferred_element_type=jnp.float32) + bc2_ref[...])
    conf_bias = (conf * VALIDATION_WEIGHT).reshape(B, S, 1)   # broadcast over keys

    # K / V projections.
    K = jnp.dot(k2, wk_ref[...], preferred_element_type=jnp.float32) + bk_ref[...]
    V = jnp.dot(v2, wv_ref[...], preferred_element_type=jnp.float32) + bv_ref[...]

    # ---- temporal bias: log(exp(-|t_j - t_i| / decay) + 1e-8) ----------------
    tds = t_ref[...]                                 # (B, 1, S)
    tb_list = []
    for b in range(B):
        tdb = tds[b]                                 # (1, S)
        diff = tdb - jnp.transpose(tdb)              # (S, S); [i, j] = t[j] - t[i]
        tb_list.append(jnp.log(jnp.exp(-jnp.abs(diff) / TEMPORAL_DECAY) + 1e-8))
    temporal_bias = jnp.stack(tb_list, axis=0)       # (B, S, S)

    bias = temporal_bias + conf_bias                 # (B, S, S)

    # ---- per-head attention (batched over B via einsum, no explicit K.T) -----
    ctx_heads = []
    attn_heads = []
    for hd in range(N_HEADS):
        Qh = Q[:, hd * D_K:(hd + 1) * D_K].reshape(B, S, D_K)
        Kh = K[:, hd * D_K:(hd + 1) * D_K].reshape(B, S, D_K)
        Vh = V[:, hd * D_V:(hd + 1) * D_V].reshape(B, S, D_V)

        s = jnp.einsum('bqd,bkd->bqk', Qh, Kh,
                       preferred_element_type=jnp.float32)      # (B, S, S)
        s = s + bias
        # TODO(synk): optional `mask` argument not exercised; would be
        #             s = jnp.where(mask == 0, -1e9, s) here.

        m = jnp.max(s, axis=-1, keepdims=True)
        e = jnp.exp(s - m)
        denom = jnp.sum(e, axis=-1, keepdims=True)
        attn = e * pl.reciprocal(denom)              # exact reciprocal (EUP)
        attn_heads.append(attn)

        ctx_heads.append(jnp.einsum('bqk,bkd->bqd', attn, Vh,
                                    preferred_element_type=jnp.float32))

    # ---- single fused output projection --------------------------------------
    ctx = jnp.concatenate(ctx_heads, axis=-1).reshape(B * S, N_HEADS * D_V)
    out = jnp.dot(ctx, wo_ref[...], preferred_element_type=jnp.float32) + bo_ref[...]
    out_ref[...] = out.reshape(B, S, D_MODEL)

    # Lane-dense attention output: (B, S, H*S); reshaped back in the wrapper.
    attn_ref[...] = jnp.concatenate(attn_heads, axis=-1)


# ----------------------------------------------------------------------------
# Wrapper
# ----------------------------------------------------------------------------
def temporal_attention(query, key, value, time_deltas, params):
    """query/key/value: (B,S,D) f32; time_deltas: (B,1,S) f32."""
    # Fuse scaled W_q with W_c1 (both consume `query`) once, outside the kernel.
    w_qc = jnp.concatenate([params["w_q"] * SCALE, params["w_c1"]], axis=1)
    b_qc = jnp.concatenate([params["b_q"] * SCALE, params["b_c1"]], axis=1)

    vmem = pl.BlockSpec(memory_space=pltpu.MemorySpace.VMEM)
    out_shape = (
        jax.ShapeDtypeStruct((B, S, D_MODEL), jnp.float32),
        jax.ShapeDtypeStruct((B, S, N_HEADS * S), jnp.float32),
    )

    fn = pl.pallas_call(
        temporal_attention_kernel,
        in_specs=[vmem] * 14,
        out_specs=(vmem, vmem),
        out_shape=out_shape,
    )
    out, attn_flat = fn(query, key, value, time_deltas,
                        w_qc, b_qc,
                        params["w_k"], params["b_k"],
                        params["w_v"], params["b_v"],
                        params["w_o"], params["b_o"],
                        params["w_c2"], params["b_c2"])

    # Recover the (B, H, S, S) layout of the reference (cheap XLA plumbing).
    attn = attn_flat.reshape(B, S, N_HEADS, S).transpose(0, 2, 1, 3)
    return out, attn


# ----------------------------------------------------------------------------
# Pure-JAX reference (mirrors the PyTorch forward exactly)
# ----------------------------------------------------------------------------
def reference(query, key, value, time_deltas, params):
    Q = query @ params["w_q"] + params["b_q"]
    K = key @ params["w_k"] + params["b_k"]
    V = value @ params["w_v"] + params["b_v"]
    Q = Q.reshape(B, S, N_HEADS, D_K).transpose(0, 2, 1, 3)
    K = K.reshape(B, S, N_HEADS, D_K).transpose(0, 2, 1, 3)
    V = V.reshape(B, S, N_HEADS, D_V).transpose(0, 2, 1, 3)

    scores = jnp.einsum("bhqd,bhkd->bhqk", Q, K) * SCALE

    t = time_deltas[:, 0, :]                               # (B, S)
    diff = t[:, None, :] - t[:, :, None]                   # (B, S, S)
    tb = jnp.log(jnp.exp(-jnp.abs(diff) / TEMPORAL_DECAY) + 1e-8)
    tb = tb[:, None, :, :]                                  # (B, 1, S, S)

    h = jnp.maximum(query @ params["w_c1"] + params["b_c1"], 0.0)
    conf = jax.nn.sigmoid(h @ params["w_c2"] + params["b_c2"])  # (B, S, 1)
    conf_bias = conf[:, None, :, :] * VALIDATION_WEIGHT         # (B, 1, S, 1)

    scores = scores + tb + conf_bias
    attn = jax.nn.softmax(scores, axis=-1)
    ctx = jnp.einsum("bhqk,bhkd->bhqd", attn, V)
    ctx = ctx.transpose(0, 2, 1, 3).reshape(B, S, N_HEADS * D_V)
    out = ctx @ params["w_o"] + params["b_o"]
    return out, attn


# ----------------------------------------------------------------------------
# Main
# ----------------------------------------------------------------------------
if __name__ == "__main__":
    key = jax.random.PRNGKey(0)
    ks = jax.random.split(key, 16)

    def init_w(k, shape, scale=0.1):
        return jax.random.normal(k, shape, dtype=jnp.float32) * scale

    params = {
        "w_q": init_w(ks[0], (D_MODEL, N_HEADS * D_K)),
        "b_q": init_w(ks[1], (1, N_HEADS * D_K), 0.02),
        "w_k": init_w(ks[2], (D_MODEL, N_HEADS * D_K)),
        "b_k": init_w(ks[3], (1, N_HEADS * D_K), 0.02),
        "w_v": init_w(ks[4], (D_MODEL, N_HEADS * D_V)),
        "b_v": init_w(ks[5], (1, N_HEADS * D_V), 0.02),
        "w_o": init_w(ks[6], (N_HEADS * D_V, D_MODEL)),
        "b_o": init_w(ks[7], (1, D_MODEL), 0.02),
        "w_c1": init_w(ks[8], (D_MODEL, D_HID)),
        "b_c1": init_w(ks[9], (1, D_HID), 0.02),
        "w_c2": init_w(ks[10], (D_HID, 1)),
        "b_c2": init_w(ks[11], (1, 1), 0.02),
    }

    query = jax.random.normal(ks[12], (B, S, D_MODEL), dtype=jnp.float32)
    kk = jax.random.normal(ks[13], (B, S, D_MODEL), dtype=jnp.float32)
    vv = jax.random.normal(ks[14], (B, S, D_MODEL), dtype=jnp.float32)
    # default time_deltas = arange(seq_len), same for every batch element
    time_deltas = jnp.broadcast_to(
        jnp.arange(S, dtype=jnp.float32)[None, None, :], (B, 1, S))

    out, attn = temporal_attention(query, kk, vv, time_deltas, params)
    out = jax.block_until_ready(out)
    attn = jax.block_until_ready(attn)

    out_ref, attn_ref = reference(query, kk, vv, time_deltas, params)

    assert out.shape == (B, S, D_MODEL)
    assert attn.shape == (B, N_HEADS, S, S)
    np.testing.assert_allclose(np.asarray(out), np.asarray(out_ref),
                               atol=1e-4, rtol=1e-4)
    np.testing.assert_allclose(np.asarray(attn), np.asarray(attn_ref),
                               atol=1e-5, rtol=1e-4)

    print("KERNEL_OK")
</pallas_src>

<mosaic_0001>
module attributes {stable_mosaic.version = 11 : i64} {
  func.func @temporal_attention_kernel(%arg0: memref<2x8x32xf32, #tpu.memory_space<vmem>>, %arg1: memref<2x8x32xf32, #tpu.memory_space<vmem>>, %arg2: memref<2x8x32xf32, #tpu.memory_space<vmem>>, %arg3: memref<2x1x8xf32, #tpu.memory_space<vmem>>, %arg4: memref<32x48xf32, #tpu.memory_space<vmem>>, %arg5: memref<1x48xf32, #tpu.memory_space<vmem>>, %arg6: memref<32x32xf32, #tpu.memory_space<vmem>>, %arg7: memref<1x32xf32, #tpu.memory_space<vmem>>, %arg8: memref<32x32xf32, #tpu.memory_space<vmem>>, %arg9: memref<1x32xf32, #tpu.memory_space<vmem>>, %arg10: memref<32x32xf32, #tpu.memory_space<vmem>>, %arg11: memref<1x32xf32, #tpu.memory_space<vmem>>, %arg12: memref<16x1xf32, #tpu.memory_space<vmem>>, %arg13: memref<1x1xf32, #tpu.memory_space<vmem>>, %arg14: memref<2x8x32xf32, #tpu.memory_space<vmem>>, %arg15: memref<2x8x32xf32, #tpu.memory_space<vmem>>) attributes {dimension_semantics = [], scalar_prefetch = 0 : i64, scratch_operands = 0 : i64, tpu.core_type = #tpu.core_type<tc>} {
    %c0 = arith.constant 0 : index
    %c0_0 = arith.constant 0 : index
    %c0_1 = arith.constant 0 : index
    %0 = vector.load %arg0[%c0, %c0_0, %c0_1] : memref<2x8x32xf32, #tpu.memory_space<vmem>>, vector<2x8x32xf32>
    %1 = vector.shape_cast %0 : vector<2x8x32xf32> to vector<16x32xf32>
    %c0_2 = arith.constant 0 : index
    %c0_3 = arith.constant 0 : index
    %c0_4 = arith.constant 0 : index
    %2 = vector.load %arg1[%c0_2, %c0_3, %c0_4] : memref<2x8x32xf32, #tpu.memory_space<vmem>>, vector<2x8x32xf32>
    %3 = vector.shape_cast %2 : vector<2x8x32xf32> to vector<16x32xf32>
    %c0_5 = arith.constant 0 : index
    %c0_6 = arith.constant 0 : index
    %c0_7 = arith.constant 0 : index
    %4 = vector.load %arg2[%c0_5, %c0_6, %c0_7] : memref<2x8x32xf32, #tpu.memory_space<vmem>>, vector<2x8x32xf32>
    %5 = vector.shape_cast %4 : vector<2x8x32xf32> to vector<16x32xf32>
    %c0_8 = arith.constant 0 : index
    %c0_9 = arith.constant 0 : index
    %6 = vector.load %arg4[%c0_8, %c0_9] : memref<32x48xf32, #tpu.memory_space<vmem>>, vector<32x48xf32>
    %cst = arith.constant dense<0.000000e+00> : vector<16x48xf32>
    %7 = tpu.matmul %1, %6, %cst {dimension_numbers = #tpu.dot_dimension_numbers<[1], [0], [0], [1], [0, 0, 1, 1], [], []>} : vector<16x32xf32>, vector<32x48xf32>, vector<16x48xf32> -> vector<16x48xf32>
    %c0_10 = arith.constant 0 : index
    %c0_11 = arith.constant 0 : index
    %8 = vector.load %arg5[%c0_10, %c0_11] : memref<1x48xf32, #tpu.memory_space<vmem>>, vector<1x48xf32>
    %9 = vector.broadcast %8 : vector<1x48xf32> to vector<16x48xf32>
    %10 = arith.addf %7, %9 : vector<16x48xf32>
    %11 = vector.extract_strided_slice %10 {offsets = [0, 0], sizes = [16, 32], strides = [1, 1]} : vector<16x48xf32> to vector<16x32xf32>
    %12 = vector.extract_strided_slice %10 {offsets = [0, 32], sizes = [16, 16], strides = [1, 1]} : vector<16x48xf32> to vector<16x16xf32>
    %cst_12 = arith.constant 0.000000e+00 : f32
    %13 = vector.broadcast %cst_12 : f32 to vector<16x16xf32>
    %14 = arith.maximumf %12, %13 : vector<16x16xf32>
    %c0_13 = arith.constant 0 : index
    %c0_14 = arith.constant 0 : index
    %15 = vector.load %arg12[%c0_13, %c0_14] : memref<16x1xf32, #tpu.memory_space<vmem>>, vector<16x1xf32>
    %cst_15 = arith.constant dense<0.000000e+00> : vector<16x1xf32>
    %16 = tpu.matmul %14, %15, %cst_15 {dimension_numbers = #tpu.dot_dimension_numbers<[1], [0], [0], [1], [0, 0, 1, 1], [], []>} : vector<16x16xf32>, vector<16x1xf32>, vector<16x1xf32> -> vector<16x1xf32>
    %c0_16 = arith.constant 0 : index
    %c0_17 = arith.constant 0 : index
    %17 = vector.load %arg13[%c0_16, %c0_17] : memref<1x1xf32, #tpu.memory_space<vmem>>, vector<1x1xf32>
    %18 = vector.broadcast %17 : vector<1x1xf32> to vector<16x1xf32>
    %19 = arith.addf %16, %18 : vector<16x1xf32>
    %20 = arith.negf %19 : vector<16x1xf32>
    %21 = math.exp %20 : vector<16x1xf32>
    %cst_18 = arith.constant 1.000000e+00 : f32
    %22 = vector.broadcast %cst_18 : f32 to vector<16x1xf32>
    %23 = arith.addf %22, %21 : vector<16x1xf32>
    %24 = arith.divf %22, %23 : vector<16x1xf32>
    %cst_19 = arith.constant 1.000000e-01 : f32
    %25 = vector.broadcast %cst_19 : f32 to vector<16x1xf32>
    %26 = arith.mulf %24, %25 : vector<16x1xf32>
    %27 = vector.shape_cast %26 : vector<16x1xf32> to vector<2x8x1xf32>
    %c0_20 = arith.constant 0 : index
    %c0_21 = arith.constant 0 : index
    %28 = vector.load %arg6[%c0_20, %c0_21] : memref<32x32xf32, #tpu.memory_space<vmem>>, vector<32x32xf32>
    %cst_22 = arith.constant dense<0.000000e+00> : vector<16x32xf32>
    %29 = tpu.matmul %3, %28, %cst_22 {dimension_numbers = #tpu.dot_dimension_numbers<[1], [0], [0], [1], [0, 0, 1, 1], [], []>} : vector<16x32xf32>, vector<32x32xf32>, vector<16x32xf32> -> vector<16x32xf32>
    %c0_23 = arith.constant 0 : index
    %c0_24 = arith.constant 0 : index
    %30 = vector.load %arg7[%c0_23, %c0_24] : memref<1x32xf32, #tpu.memory_space<vmem>>, vector<1x32xf32>
    %31 = vector.broadcast %30 : vector<1x32xf32> to vector<16x32xf32>
    %32 = arith.addf %29, %31 : vector<16x32xf32>
    %c0_25 = arith.constant 0 : index
    %c0_26 = arith.constant 0 : index
    %33 = vector.load %arg8[%c0_25, %c0_26] : memref<32x32xf32, #tpu.memory_space<vmem>>, vector<32x32xf32>
    %cst_27 = arith.constant dense<0.000000e+00> : vector<16x32xf32>
    %34 = tpu.matmul %5, %33, %cst_27 {dimension_numbers = #tpu.dot_dimension_numbers<[1], [0], [0], [1], [0, 0, 1, 1], [], []>} : vector<16x32xf32>, vector<32x32xf32>, vector<16x32xf32> -> vector<16x32xf32>
    %c0_28 = arith.constant 0 : index
    %c0_29 = arith.constant 0 : index
    %35 = vector.load %arg9[%c0_28, %c0_29] : memref<1x32xf32, #tpu.memory_space<vmem>>, vector<1x32xf32>
    %36 = vector.broadcast %35 : vector<1x32xf32> to vector<16x32xf32>
    %37 = arith.addf %34, %36 : vector<16x32xf32>
    %c0_30 = arith.constant 0 : index
    %c0_31 = arith.constant 0 : index
    %c0_32 = arith.constant 0 : index
    %38 = vector.load %arg3[%c0_30, %c0_31, %c0_32] : memref<2x1x8xf32, #tpu.memory_space<vmem>>, vector<2x1x8xf32>
    %39 = vector.extract_strided_slice %38 {offsets = [0, 0, 0], sizes = [1, 1, 8], strides = [1, 1, 1]} : vector<2x1x8xf32> to vector<1x1x8xf32>
    %40 = vector.shape_cast %39 : vector<1x1x8xf32> to vector<1x8xf32>
    %41 = tpu.transpose %40, [1, 0] : vector<1x8xf32> -> vector<8x1xf32>
    %42 = vector.broadcast %40 : vector<1x8xf32> to vector<8x8xf32>
    %43 = vector.broadcast %41 : vector<8x1xf32> to vector<8x8xf32>
    %44 = arith.subf %42, %43 : vector<8x8xf32>
    %45 = math.absf %44 : vector<8x8xf32>
    %cst_33 = arith.constant 0.000000e+00 : f32
    %46 = vector.broadcast %cst_33 : f32 to vector<8x8xf32>
    %47 = arith.subf %46, %45 : vector<8x8xf32>
    %cst_34 = arith.constant 0.899999976 : f32
    %48 = vector.broadcast %cst_34 : f32 to vector<8x8xf32>
    %49 = arith.divf %47, %48 : vector<8x8xf32>
    %50 = math.exp %49 : vector<8x8xf32>
    %cst_35 = arith.constant 9.99999993E-9 : f32
    %51 = vector.broadcast %cst_35 : f32 to vector<8x8xf32>
    %52 = arith.addf %50, %51 : vector<8x8xf32>
    %53 = math.log %52 : vector<8x8xf32>
    %54 = vector.extract_strided_slice %38 {offsets = [1, 0, 0], sizes = [1, 1, 8], strides = [1, 1, 1]} : vector<2x1x8xf32> to vector<1x1x8xf32>
    %55 = vector.shape_cast %54 : vector<1x1x8xf32> to vector<1x8xf32>
    %56 = tpu.transpose %55, [1, 0] : vector<1x8xf32> -> vector<8x1xf32>
    %57 = vector.broadcast %55 : vector<1x8xf32> to vector<8x8xf32>
    %58 = vector.broadcast %56 : vector<8x1xf32> to vector<8x8xf32>
    %59 = arith.subf %57, %58 : vector<8x8xf32>
    %60 = math.absf %59 : vector<8x8xf32>
    %cst_36 = arith.constant 0.000000e+00 : f32
    %61 = vector.broadcast %cst_36 : f32 to vector<8x8xf32>
    %62 = arith.subf %61, %60 : vector<8x8xf32>
    %cst_37 = arith.constant 0.899999976 : f32
    %63 = vector.broadcast %cst_37 : f32 to vector<8x8xf32>
    %64 = arith.divf %62, %63 : vector<8x8xf32>
    %65 = math.exp %64 : vector<8x8xf32>
    %cst_38 = arith.constant 9.99999993E-9 : f32
    %66 = vector.broadcast %cst_38 : f32 to vector<8x8xf32>
    %67 = arith.addf %65, %66 : vector<8x8xf32>
    %68 = math.log %67 : vector<8x8xf32>
    %69 = vector.shape_cast %53 : vector<8x8xf32> to vector<1x8x8xf32>
    %70 = vector.shape_cast %68 : vector<8x8xf32> to vector<1x8x8xf32>
    %71 = tpu.concatenate %69, %70 in 0 : vector<1x8x8xf32>, vector<1x8x8xf32> -> vector<2x8x8xf32>
    %72 = vector.broadcast %27 : vector<2x8x1xf32> to vector<2x8x8xf32>
    %73 = arith.addf %71, %72 : vector<2x8x8xf32>
    %74 = vector.extract_strided_slice %11 {offsets = [0, 0], sizes = [16, 8], strides = [1, 1]} : vector<16x32xf32> to vector<16x8xf32>
    %75 = vector.shape_cast %74 : vector<16x8xf32> to vector<2x8x8xf32>
    %76 = vector.extract_strided_slice %32 {offsets = [0, 0], sizes = [16, 8], strides = [1, 1]} : vector<16x32xf32> to vector<16x8xf32>
    %77 = vector.shape_cast %76 : vector<16x8xf32> to vector<2x8x8xf32>
    %78 = vector.extract_strided_slice %37 {offsets = [0, 0], sizes = [16, 8], strides = [1, 1]} : vector<16x32xf32> to vector<16x8xf32>
    %79 = vector.shape_cast %78 : vector<16x8xf32> to vector<2x8x8xf32>
    "tpu.trace_start"() <{level = 10 : i32, message = "bqd,bkd->bqk"}> : () -> ()
    %cst_39 = arith.constant dense<0.000000e+00> : vector<2x8x8xf32>
    %80 = tpu.matmul %75, %77, %cst_39 {dimension_numbers = #tpu.dot_dimension_numbers<[2], [2], [1], [1], [0, 0, 0, 1, 1, 1], [0], [0]>} : vector<2x8x8xf32>, vector<2x8x8xf32>, vector<2x8x8xf32> -> vector<2x8x8xf32>
    "tpu.trace_stop"() : () -> ()
    %81 = arith.addf %80, %73 : vector<2x8x8xf32>
    %cst_40 = arith.constant dense<0xFF800000> : vector<2x8xf32>
    %82 = vector.multi_reduction <maximumf>, %81, %cst_40 [2] : vector<2x8x8xf32> to vector<2x8xf32>
    %83 = vector.shape_cast %82 : vector<2x8xf32> to vector<2x8x1xf32>
    %84 = vector.broadcast %83 : vector<2x8x1xf32> to vector<2x8x8xf32>
    %85 = arith.subf %81, %84 : vector<2x8x8xf32>
    %86 = math.exp %85 : vector<2x8x8xf32>
    %cst_41 = arith.constant dense<0.000000e+00> : vector<2x8xf32>
    %87 = vector.multi_reduction <add>, %86, %cst_41 [2] : vector<2x8x8xf32> to vector<2x8xf32>
    %88 = vector.shape_cast %87 : vector<2x8xf32> to vector<2x8x1xf32>
    %89 = tpu.reciprocal %88 : vector<2x8x1xf32> -> vector<2x8x1xf32>
    %90 = vector.broadcast %89 : vector<2x8x1xf32> to vector<2x8x8xf32>
    %91 = arith.mulf %86, %90 : vector<2x8x8xf32>
    "tpu.trace_start"() <{level = 10 : i32, message = "bqk,bkd->bqd"}> : () -> ()
    %cst_42 = arith.constant dense<0.000000e+00> : vector<2x8x8xf32>
    %92 = tpu.matmul %91, %79, %cst_42 {dimension_numbers = #tpu.dot_dimension_numbers<[2], [1], [1], [2], [0, 0, 0, 1, 1, 2], [0], [0]>} : vector<2x8x8xf32>, vector<2x8x8xf32>, vector<2x8x8xf32> -> vector<2x8x8xf32>
    "tpu.trace_stop"() : () -> ()
    %93 = vector.extract_strided_slice %11 {offsets = [0, 8], sizes = [16, 8], strides = [1, 1]} : vector<16x32xf32> to vector<16x8xf32>
    %94 = vector.shape_cast %93 : vector<16x8xf32> to vector<2x8x8xf32>
    %95 = vector.extract_strided_slice %32 {offsets = [0, 8], sizes = [16, 8], strides = [1, 1]} : vector<16x32xf32> to vector<16x8xf32>
    %96 = vector.shape_cast %95 : vector<16x8xf32> to vector<2x8x8xf32>
    %97 = vector.extract_strided_slice %37 {offsets = [0, 8], sizes = [16, 8], strides = [1, 1]} : vector<16x32xf32> to vector<16x8xf32>
    %98 = vector.shape_cast %97 : vector<16x8xf32> to vector<2x8x8xf32>
    "tpu.trace_start"() <{level = 10 : i32, message = "bqd,bkd->bqk"}> : () -> ()
    %cst_43 = arith.constant dense<0.000000e+00> : vector<2x8x8xf32>
    %99 = tpu.matmul %94, %96, %cst_43 {dimension_numbers = #tpu.dot_dimension_numbers<[2], [2], [1], [1], [0, 0, 0, 1, 1, 1], [0], [0]>} : vector<2x8x8xf32>, vector<2x8x8xf32>, vector<2x8x8xf32> -> vector<2x8x8xf32>
    "tpu.trace_stop"() : () -> ()
    %100 = arith.addf %99, %73 : vector<2x8x8xf32>
    %cst_44 = arith.constant dense<0xFF800000> : vector<2x8xf32>
    %101 = vector.multi_reduction <maximumf>, %100, %cst_44 [2] : vector<2x8x8xf32> to vector<2x8xf32>
    %102 = vector.shape_cast %101 : vector<2x8xf32> to vector<2x8x1xf32>
    %103 = vector.broadcast %102 : vector<2x8x1xf32> to vector<2x8x8xf32>
    %104 = arith.subf %100, %103 : vector<2x8x8xf32>
    %105 = math.exp %104 : vector<2x8x8xf32>
    %cst_45 = arith.constant dense<0.000000e+00> : vector<2x8xf32>
    %106 = vector.multi_reduction <add>, %105, %cst_45 [2] : vector<2x8x8xf32> to vector<2x8xf32>
    %107 = vector.shape_cast %106 : vector<2x8xf32> to vector<2x8x1xf32>
    %108 = tpu.reciprocal %107 : vector<2x8x1xf32> -> vector<2x8x1xf32>
    %109 = vector.broadcast %108 : vector<2x8x1xf32> to vector<2x8x8xf32>
    %110 = arith.mulf %105, %109 : vector<2x8x8xf32>
    "tpu.trace_start"() <{level = 10 : i32, message = "bqk,bkd->bqd"}> : () -> ()
    %cst_46 = arith.constant dense<0.000000e+00> : vector<2x8x8xf32>
    %111 = tpu.matmul %110, %98, %cst_46 {dimension_numbers = #tpu.dot_dimension_numbers<[2], [1], [1], [2], [0, 0, 0, 1, 1, 2], [0], [0]>} : vector<2x8x8xf32>, vector<2x8x8xf32>, vector<2x8x8xf32> -> vector<2x8x8xf32>
    "tpu.trace_stop"() : () -> ()
    %112 = vector.extract_strided_slice %11 {offsets = [0, 16], sizes = [16, 8], strides = [1, 1]} : vector<16x32xf32> to vector<16x8xf32>
    %113 = vector.shape_cast %112 : vector<16x8xf32> to vector<2x8x8xf32>
    %114 = vector.extract_strided_slice %32 {offsets = [0, 16], sizes = [16, 8], strides = [1, 1]} : vector<16x32xf32> to vector<16x8xf32>
    %115 = vector.shape_cast %114 : vector<16x8xf32> to vector<2x8x8xf32>
    %116 = vector.extract_strided_slice %37 {offsets = [0, 16], sizes = [16, 8], strides = [1, 1]} : vector<16x32xf32> to vector<16x8xf32>
    %117 = vector.shape_cast %116 : vector<16x8xf32> to vector<2x8x8xf32>
    "tpu.trace_start"() <{level = 10 : i32, message = "bqd,bkd->bqk"}> : () -> ()
    %cst_47 = arith.constant dense<0.000000e+00> : vector<2x8x8xf32>
    %118 = tpu.matmul %113, %115, %cst_47 {dimension_numbers = #tpu.dot_dimension_numbers<[2], [2], [1], [1], [0, 0, 0, 1, 1, 1], [0], [0]>} : vector<2x8x8xf32>, vector<2x8x8xf32>, vector<2x8x8xf32> -> vector<2x8x8xf32>
    "tpu.trace_stop"() : () -> ()
    %119 = arith.addf %118, %73 : vector<2x8x8xf32>
    %cst_48 = arith.constant dense<0xFF800000> : vector<2x8xf32>
    %120 = vector.multi_reduction <maximumf>, %119, %cst_48 [2] : vector<2x8x8xf32> to vector<2x8xf32>
    %121 = vector.shape_cast %120 : vector<2x8xf32> to vector<2x8x1xf32>
    %122 = vector.broadcast %121 : vector<2x8x1xf32> to vector<2x8x8xf32>
    %123 = arith.subf %119, %122 : vector<2x8x8xf32>
    %124 = math.exp %123 : vector<2x8x8xf32>
    %cst_49 = arith.constant dense<0.000000e+00> : vector<2x8xf32>
    %125 = vector.multi_reduction <add>, %124, %cst_49 [2] : vector<2x8x8xf32> to vector<2x8xf32>
    %126 = vector.shape_cast %125 : vector<2x8xf32> to vector<2x8x1xf32>
    %127 = tpu.reciprocal %126 : vector<2x8x1xf32> -> vector<2x8x1xf32>
    %128 = vector.broadcast %127 : vector<2x8x1xf32> to vector<2x8x8xf32>
    %129 = arith.mulf %124, %128 : vector<2x8x8xf32>
    "tpu.trace_start"() <{level = 10 : i32, message = "bqk,bkd->bqd"}> : () -> ()
    %cst_50 = arith.constant dense<0.000000e+00> : vector<2x8x8xf32>
    %130 = tpu.matmul %129, %117, %cst_50 {dimension_numbers = #tpu.dot_dimension_numbers<[2], [1], [1], [2], [0, 0, 0, 1, 1, 2], [0], [0]>} : vector<2x8x8xf32>, vector<2x8x8xf32>, vector<2x8x8xf32> -> vector<2x8x8xf32>
    "tpu.trace_stop"() : () -> ()
    %131 = vector.extract_strided_slice %11 {offsets = [0, 24], sizes = [16, 8], strides = [1, 1]} : vector<16x32xf32> to vector<16x8xf32>
    %132 = vector.shape_cast %131 : vector<16x8xf32> to vector<2x8x8xf32>
    %133 = vector.extract_strided_slice %32 {offsets = [0, 24], sizes = [16, 8], strides = [1, 1]} : vector<16x32xf32> to vector<16x8xf32>
    %134 = vector.shape_cast %133 : vector<16x8xf32> to vector<2x8x8xf32>
    %135 = vector.extract_strided_slice %37 {offsets = [0, 24], sizes = [16, 8], strides = [1, 1]} : vector<16x32xf32> to vector<16x8xf32>
    %136 = vector.shape_cast %135 : vector<16x8xf32> to vector<2x8x8xf32>
    "tpu.trace_start"() <{level = 10 : i32, message = "bqd,bkd->bqk"}> : () -> ()
    %cst_51 = arith.constant dense<0.000000e+00> : vector<2x8x8xf32>
    %137 = tpu.matmul %132, %134, %cst_51 {dimension_numbers = #tpu.dot_dimension_numbers<[2], [2], [1], [1], [0, 0, 0, 1, 1, 1], [0], [0]>} : vector<2x8x8xf32>, vector<2x8x8xf32>, vector<2x8x8xf32> -> vector<2x8x8xf32>
    "tpu.trace_stop"() : () -> ()
    %138 = arith.addf %137, %73 : vector<2x8x8xf32>
    %cst_52 = arith.constant dense<0xFF800000> : vector<2x8xf32>
    %139 = vector.multi_reduction <maximumf>, %138, %cst_52 [2] : vector<2x8x8xf32> to vector<2x8xf32>
    %140 = vector.shape_cast %139 : vector<2x8xf32> to vector<2x8x1xf32>
    %141 = vector.broadcast %140 : vector<2x8x1xf32> to vector<2x8x8xf32>
    %142 = arith.subf %138, %141 : vector<2x8x8xf32>
    %143 = math.exp %142 : vector<2x8x8xf32>
    %cst_53 = arith.constant dense<0.000000e+00> : vector<2x8xf32>
    %144 = vector.multi_reduction <add>, %143, %cst_53 [2] : vector<2x8x8xf32> to vector<2x8xf32>
    %145 = vector.shape_cast %144 : vector<2x8xf32> to vector<2x8x1xf32>
    %146 = tpu.reciprocal %145 : vector<2x8x1xf32> -> vector<2x8x1xf32>
    %147 = vector.broadcast %146 : vector<2x8x1xf32> to vector<2x8x8xf32>
    %148 = arith.mulf %143, %147 : vector<2x8x8xf32>
    "tpu.trace_start"() <{level = 10 : i32, message = "bqk,bkd->bqd"}> : () -> ()
    %cst_54 = arith.constant dense<0.000000e+00> : vector<2x8x8xf32>
    %149 = tpu.matmul %148, %136, %cst_54 {dimension_numbers = #tpu.dot_dimension_numbers<[2], [1], [1], [2], [0, 0, 0, 1, 1, 2], [0], [0]>} : vector<2x8x8xf32>, vector<2x8x8xf32>, vector<2x8x8xf32> -> vector<2x8x8xf32>
    "tpu.trace_stop"() : () -> ()
    %150 = tpu.concatenate %92, %111, %130, %149 in 2 : vector<2x8x8xf32>, vector<2x8x8xf32>, vector<2x8x8xf32>, vector<2x8x8xf32> -> vector<2x8x32xf32>
    %151 = vector.shape_cast %150 : vector<2x8x32xf32> to vector<16x32xf32>
    %c0_55 = arith.constant 0 : index
    %c0_56 = arith.constant 0 : index
    %152 = vector.load %arg10[%c0_55, %c0_56] : memref<32x32xf32, #tpu.memory_space<vmem>>, vector<32x32xf32>
    %cst_57 = arith.constant dense<0.000000e+00> : vector<16x32xf32>
    %153 = tpu.matmul %151, %152, %cst_57 {dimension_numbers = #tpu.dot_dimension_numbers<[1], [0], [0], [1], [0, 0, 1, 1], [], []>} : vector<16x32xf32>, vector<32x32xf32>, vector<16x32xf32> -> vector<16x32xf32>
    %c0_58 = arith.constant 0 : index
    %c0_59 = arith.constant 0 : index
    %154 = vector.load %arg11[%c0_58, %c0_59] : memref<1x32xf32, #tpu.memory_space<vmem>>, vector<1x32xf32>
    %155 = vector.broadcast %154 : vector<1x32xf32> to vector<16x32xf32>
    %156 = arith.addf %153, %155 : vector<16x32xf32>
    %157 = vector.shape_cast %156 : vector<16x32xf32> to vector<2x8x32xf32>
    %c0_60 = arith.constant 0 : index
    %c0_61 = arith.constant 0 : index
    %c0_62 = arith.constant 0 : index
    %158 = vector.load %arg14[%c0_60, %c0_61, %c0_62] : memref<2x8x32xf32, #tpu.memory_space<vmem>>, vector<2x8x32xf32>
    tpu.vector_store %arg14[%c0_60, %c0_61, %c0_62], %157 {strides = array<i32>} : memref<2x8x32xf32, #tpu.memory_space<vmem>>, vector<2x8x32xf32>,
    %159 = tpu.concatenate %91, %110, %129, %148 in 2 : vector<2x8x8xf32>, vector<2x8x8xf32>, vector<2x8x8xf32>, vector<2x8x8xf32> -> vector<2x8x32xf32>
    %c0_63 = arith.constant 0 : index
    %c0_64 = arith.constant 0 : index
    %c0_65 = arith.constant 0 : index
    %160 = vector.load %arg15[%c0_63, %c0_64, %c0_65] : memref<2x8x32xf32, #tpu.memory_space<vmem>>, vector<2x8x32xf32>
    tpu.vector_store %arg15[%c0_63, %c0_64, %c0_65], %159 {strides = array<i32>} : memref<2x8x32xf32, #tpu.memory_space<vmem>>, vector<2x8x32xf32>,
    return
  }
}

</mosaic_0001>

<llo_original>
// kernel: tpu_custom_call.1
$region0: #{tpu_custom_call.1}
  #allocation0 [shape = 'u32[]', space=smem, size = 0x4, offset = 0x4, fixed_abs, tag = 'smem constant byte address 0x4 - core index']
  #allocation1 [shape = 'u32[72,128]{1,0:T(1,128)}', space=vmem, size = 0x9000, scoped, tag = 'internal scratch']
  #allocation2 [shape = 'f32[1,1]{1,0:T(1,128)S(1)}', space=vmem, size = 0x200, scoped, tag = 'scoped memory for tpu_custom_call.1']
  %s0 = inlined_call_operand.vmem [shape: f32[2,8,32], index: 0, kind: input, shape index: {}]
  %s1 = inlined_call_operand.hbm [shape: f32[2,8,32], index: 1, kind: input, shape index: {}]
  %s2 = inlined_call_operand.hbm [shape: f32[2,8,32], index: 2, kind: input, shape index: {}]
  %s3 = inlined_call_operand.vmem [shape: f32[2,1,8], index: 3, kind: input, shape index: {}]
  %s4 = inlined_call_operand.hbm [shape: f32[32,48], index: 4, kind: input, shape index: {}]
  %s5 = inlined_call_operand.vmem [shape: f32[1,48], index: 5, kind: input, shape index: {}]
  %s6 = inlined_call_operand.hbm [shape: f32[32,32], index: 6, kind: input, shape index: {}]
  %s7 = inlined_call_operand.vmem [shape: f32[1,32], index: 7, kind: input, shape index: {}]
  %s8 = inlined_call_operand.hbm [shape: f32[32,32], index: 8, kind: input, shape index: {}]
  %s9 = inlined_call_operand.vmem [shape: f32[1,32], index: 9, kind: input, shape index: {}]
  %s10 = inlined_call_operand.hbm [shape: f32[32,32], index: 10, kind: input, shape index: {}]
  %s11 = inlined_call_operand.vmem [shape: f32[1,32], index: 11, kind: input, shape index: {}]
  %s12 = inlined_call_operand.vmem [shape: f32[16,1], index: 12, kind: input, shape index: {}]
  %s13 = inlined_call_operand.<no memory space> [shape: f32[1,1], index: 13, kind: input, shape index: {}]
  %s14 = inlined_call_operand.hbm [shape: f32[2,8,32], index: 14, kind: output, shape index: {0}]
  %s15 = inlined_call_operand.hbm [shape: f32[2,8,32], index: 15, kind: output, shape index: {1}]
  %16 = xla_tuple %s14, %s15
  %s17 = sld [smem:[#allocation0]]
  $region98: #{tpu_custom_call.1} parent=0
    _
  %s19 = ssub.s32 1, %s17
  %s20 = scalar_select 0, %s19, %s17
  %v21 = vstv %s13
  %22 = vst [vmem:[#allocation2] sm:$0x1] %v21
  $region1: #{tpu_custom_call.1} parent=0
    #allocation3 [shape = 'u8[8192]{0}', space=vmem, size = 0x2000, scoped, tag = 'input window, operand 1, single buffered']
    #allocation4 [shape = 's32[1]{0}', space=sflag, size = 0x4, scoped, tag = 'scoped memory for tpu_custom_call.1']
    #allocation5 [shape = 's32[1]{0}', space=sflag, size = 0x4, scoped, tag = 'scoped memory for tpu_custom_call.1']
    #allocation6 [shape = 'u8[8192]{0}', space=vmem, size = 0x2000, scoped, tag = 'input window, operand 2, single buffered']
    #allocation7 [shape = 's32[1]{0}', space=sflag, size = 0x4, scoped, tag = 'scoped memory for tpu_custom_call.1']
    #allocation8 [shape = 'u8[16384]{0}', space=vmem, size = 0x4000, scoped, tag = 'input window, operand 4, single buffered']
    #allocation9 [shape = 'u8[16384]{0}', space=vmem, size = 0x4000, scoped, tag = 'input window, operand 6, single buffered']
    #allocation10 [shape = 's32[1]{0}', space=sflag, size = 0x4, scoped, tag = 'scoped memory for tpu_custom_call.1']
    #allocation11 [shape = 'u8[16384]{0}', space=vmem, size = 0x4000, scoped, tag = 'input window, operand 8, single buffered']
    #allocation12 [shape = 'u8[16384]{0}', space=vmem, size = 0x4000, scoped, tag = 'input window, operand 10, single buffered']
    #allocation13 [shape = 's32[1]{0}', space=sflag, size = 0x4, scoped, tag = 'scoped memory for tpu_custom_call.1']
    #allocation14 [shape = 'u8[8192]{0}', space=vmem, size = 0x2000, scoped, tag = 'output window, operand 0, single buffered']
    #allocation15 [shape = 'u8[8192]{0}', space=vmem, size = 0x2000, scoped, tag = 'output window, operand 1, single buffered']
    #allocation16 [shape = 's32[1]{0}', space=sflag, size = 0x4, scoped, tag = 'scoped memory for tpu_custom_call.1']
    %23 = vsyncpa [#allocation4], 0
    %24 = vsyncpa [#allocation7], 0
    %25 = vsyncpa [#allocation10], 0
    %26 = vsyncpa [#allocation13], 0
    %27 = vsyncpa [#allocation5], 0
    %28 = vsyncpa [#allocation16], 0
    // Predicated region
    $region2: #{tpu_custom_call.1} parent=1 // pred_check
      _
    $region3: #{tpu_custom_call.1} parent=1 // pred_check_branch
      %30 = sbr.rel (0) target = $region5
    $region4: #{tpu_custom_call.1} parent=1 // pred_region
      _
    $region5: #{tpu_custom_call.1} parent=1 // pred_fallthru
      _
    // Predicated region
    $region6: #{tpu_custom_call.1} parent=1 // pred_check
      _
    $region7: #{tpu_custom_call.1} parent=1 // pred_check_branch
      %32 = sbr.rel (0) target = $region9
    $region8: #{tpu_custom_call.1} parent=1 // pred_region
      %34 = vsyncadd [#allocation4], 0
      %s35 = sshll.u32 %s1, 4
      %s36 = int_to_ptr.hbm [resolvable:$true] %s35
      %s37 = sshll.u32 [#allocation3], 4
      %s38 = int_to_ptr.vmem [resolvable:$true] %s37
      %43 = dma.hbm_to_vmem [thread:$0]  %s36, 256, %s38, [#allocation4], 128, 128, 8
    $region9: #{tpu_custom_call.1} parent=1 // pred_fallthru
      _
    // Predicated region
    $region10: #{tpu_custom_call.1} parent=1 // pred_check
      _
    $region11: #{tpu_custom_call.1} parent=1 // pred_check_branch
      %45 = sbr.rel (0) target = $region13
    $region12: #{tpu_custom_call.1} parent=1 // pred_region
      %47 = vsyncadd [#allocation7], 0
      %s48 = sshll.u32 %s2, 4
      %s49 = int_to_ptr.hbm [resolvable:$true] %s48
      %s50 = sshll.u32 [#allocation6], 4
      %s51 = int_to_ptr.vmem [resolvable:$true] %s50
      %56 = dma.hbm_to_vmem [thread:$0]  %s49, 256, %s51, [#allocation7], 128, 128, 8
    $region13: #{tpu_custom_call.1} parent=1 // pred_fallthru
      _
    // Predicated region
    $region14: #{tpu_custom_call.1} parent=1 // pred_check
      _
    $region15: #{tpu_custom_call.1} parent=1 // pred_check_branch
      %58 = sbr.rel (0) target = $region17
    $region16: #{tpu_custom_call.1} parent=1 // pred_region
      _
    $region17: #{tpu_custom_call.1} parent=1 // pred_fallthru
      _
    // Predicated region
    $region18: #{tpu_custom_call.1} parent=1 // pred_check
      _
    $region19: #{tpu_custom_call.1} parent=1 // pred_check_branch
      %60 = sbr.rel (0) target = $region21
    $region20: #{tpu_custom_call.1} parent=1 // pred_region
      %62 = vsyncadd [#allocation7], 0
      %s63 = sshll.u32 %s4, 4
      %s64 = int_to_ptr.hbm [resolvable:$true] %s63
      %s65 = sshll.u32 [#allocation8], 4
      %s66 = int_to_ptr.vmem [resolvable:$true] %s65
      %71 = dma.hbm_to_vmem [thread:$0]  %s64, 512, %s66, [#allocation7], 128, 128, 8
    $region21: #{tpu_custom_call.1} parent=1 // pred_fallthru
      _
    // Predicated region
    $region22: #{tpu_custom_call.1} parent=1 // pred_check
      _
    $region23: #{tpu_custom_call.1} parent=1 // pred_check_branch
      %73 = sbr.rel (0) target = $region25
    $region24: #{tpu_custom_call.1} parent=1 // pred_region
      _
    $region25: #{tpu_custom_call.1} parent=1 // pred_fallthru
      _
    // Predicated region
    $region26: #{tpu_custom_call.1} parent=1 // pred_check
      _
    $region27: #{tpu_custom_call.1} parent=1 // pred_check_branch
      %75 = sbr.rel (0) target = $region29
    $region28: #{tpu_custom_call.1} parent=1 // pred_region
      %77 = vsyncadd [#allocation10], 0
      %s78 = sshll.u32 %s6, 4
      %s79 = int_to_ptr.hbm [resolvable:$true] %s78
      %s80 = sshll.u32 [#allocation9], 4
      %s81 = int_to_ptr.vmem [resolvable:$true] %s80
      %86 = dma.hbm_to_vmem [thread:$0]  %s79, 512, %s81, [#allocation10], 128, 128, 8
    $region29: #{tpu_custom_call.1} parent=1 // pred_fallthru
      _
    // Predicated region
    $region30: #{tpu_custom_call.1} parent=1 // pred_check
      _
    $region31: #{tpu_custom_call.1} parent=1 // pred_check_branch
      %88 = sbr.rel (0) target = $region33
    $region32: #{tpu_custom_call.1} parent=1 // pred_region
      _
    $region33: #{tpu_custom_call.1} parent=1 // pred_fallthru
      _
    // Predicated region
    $region34: #{tpu_custom_call.1} parent=1 // pred_check
      _
    $region35: #{tpu_custom_call.1} parent=1 // pred_check_branch
      %90 = sbr.rel (0) target = $region37
    $region36: #{tpu_custom_call.1} parent=1 // pred_region
      %92 = vsyncadd [#allocation10], 0
      %s93 = sshll.u32 %s8, 4
      %s94 = int_to_ptr.hbm [resolvable:$true] %s93
      %s95 = sshll.u32 [#allocation11], 4
      %s96 = int_to_ptr.vmem [resolvable:$true] %s95
      %101 = dma.hbm_to_vmem [thread:$0]  %s94, 512, %s96, [#allocation10], 128, 128, 8
    $region37: #{tpu_custom_call.1} parent=1 // pred_fallthru
      _
    // Predicated region
    $region38: #{tpu_custom_call.1} parent=1 // pred_check
      _
    $region39: #{tpu_custom_call.1} parent=1 // pred_check_branch
      %103 = sbr.rel (0) target = $region41
    $region40: #{tpu_custom_call.1} parent=1 // pred_region
      _
    $region41: #{tpu_custom_call.1} parent=1 // pred_fallthru
      _
    // Predicated region
    $region42: #{tpu_custom_call.1} parent=1 // pred_check
      _
    $region43: #{tpu_custom_call.1} parent=1 // pred_check_branch
      %105 = sbr.rel (0) target = $region45
    $region44: #{tpu_custom_call.1} parent=1 // pred_region
      %107 = vsyncadd [#allocation13], 0
      %s108 = sshll.u32 %s10, 4
      %s109 = int_to_ptr.hbm [resolvable:$true] %s108
      %s110 = sshll.u32 [#allocation12], 4
      %s111 = int_to_ptr.vmem [resolvable:$true] %s110
      %116 = dma.hbm_to_vmem [thread:$0]  %s109, 512, %s111, [#allocation13], 128, 128, 8
    $region45: #{tpu_custom_call.1} parent=1 // pred_fallthru
      _
    // Predicated region
    $region46: #{tpu_custom_call.1} parent=1 // pred_check
      _
    $region47: #{tpu_custom_call.1} parent=1 // pred_check_branch
      %118 = sbr.rel (0) target = $region49
    $region48: #{tpu_custom_call.1} parent=1 // pred_region
      _
    $region49: #{tpu_custom_call.1} parent=1 // pred_fallthru
      _
    // Predicated region
    $region50: #{tpu_custom_call.1} parent=1 // pred_check
      _
    $region51: #{tpu_custom_call.1} parent=1 // pred_check_branch
      %120 = sbr.rel (0) target = $region53
    $region52: #{tpu_custom_call.1} parent=1 // pred_region
      _
    $region53: #{tpu_custom_call.1} parent=1 // pred_fallthru
      _
    // Predicated region
    $region54: #{tpu_custom_call.1} parent=1 // pred_check
      _
    $region55: #{tpu_custom_call.1} parent=1 // pred_check_branch
      %122 = sbr.rel (0) target = $region57
    $region56: #{tpu_custom_call.1} parent=1 // pred_region
      _
    $region57: #{tpu_custom_call.1} parent=1 // pred_fallthru
      _
    // Predicated region
    $region58: #{tpu_custom_call.1} parent=1 // pred_check
      _
    $region59: #{tpu_custom_call.1} parent=1 // pred_check_branch
      %124 = sbr.rel (0) target = $region61
    $region60: #{tpu_custom_call.1} parent=1 // pred_region
      %126 = dma.done [#allocation4], 256
    $region61: #{tpu_custom_call.1} parent=1 // pred_fallthru
      _
    // Predicated region
    $region62: #{tpu_custom_call.1} parent=1 // pred_check
      _
    $region63: #{tpu_custom_call.1} parent=1 // pred_check_branch
      %128 = sbr.rel (0) target = $region65
    $region64: #{tpu_custom_call.1} parent=1 // pred_region
      %130 = dma.done [#allocation7], 256
    $region65: #{tpu_custom_call.1} parent=1 // pred_fallthru
      _
    // Predicated region
    $region66: #{tpu_custom_call.1} parent=1 // pred_check
      _
    $region67: #{tpu_custom_call.1} parent=1 // pred_check_branch
      %132 = sbr.rel (0) target = $region69
    $region68: #{tpu_custom_call.1} parent=1 // pred_region
      %134 = dma.done [#allocation7], 512
    $region69: #{tpu_custom_call.1} parent=1 // pred_fallthru
      _
    // Predicated region
    $region70: #{tpu_custom_call.1} parent=1 // pred_check
      _
    $region71: #{tpu_custom_call.1} parent=1 // pred_check_branch
      %136 = sbr.rel (0) target = $region73
    $region72: #{tpu_custom_call.1} parent=1 // pred_region
      %138 = dma.done [#allocation10], 512
    $region73: #{tpu_custom_call.1} parent=1 // pred_fallthru
      _
    // Predicated region
    $region74: #{tpu_custom_call.1} parent=1 // pred_check
      _
    $region75: #{tpu_custom_call.1} parent=1 // pred_check_branch
      %140 = sbr.rel (0) target = $region77
    $region76: #{tpu_custom_call.1} parent=1 // pred_region
      %142 = dma.done [#allocation10], 512
    $region77: #{tpu_custom_call.1} parent=1 // pred_fallthru
      _
    // Predicated region
    $region78: #{tpu_custom_call.1} parent=1 // pred_check
      _
    $region79: #{tpu_custom_call.1} parent=1 // pred_check_branch
      %144 = sbr.rel (0) target = $region81
    $region80: #{tpu_custom_call.1} parent=1 // pred_region
      %146 = dma.done [#allocation13], 512
    $region81: #{tpu_custom_call.1} parent=1 // pred_fallthru
      _
    %v147 = vld [vmem:[%s0] sm:$0xff]
    %v148 = vld [vmem:[%s0 + $0x8] sm:$0xff]
    %v149 = vld [vmem:[#allocation3] sm:$0xff]
    %v150 = vld [vmem:[#allocation3 + $0x8] sm:$0xff]
    %v151 = vld [vmem:[#allocation6] sm:$0xff]
    %v152 = vld [vmem:[#allocation6 + $0x8] sm:$0xff]
    %v153 = vld [vmem:[#allocation8] sm:$0xff]
    %v154 = vld [vmem:[#allocation8 + $0x8] sm:$0xff]
    %v155 = vld [vmem:[#allocation8 + $0x10] sm:$0xff]
    %v156 = vld [vmem:[#allocation8 + $0x18] sm:$0xff]
    %v157 = vld [vmem:[%s5] sm:$0x1]
    %v159 = vperm.slane %v157, 0
    %vm161 = vcmask 261120
    %v163 = vsel %vm161, %v147, 0
    %v166 = vsel %vm161, %v148, 0
    %168 = vmatpush.msra.mxu0 0.0
    %169 = vmatpush.msra.mxu0 0.0
    %170 = vmatpush.msra.mxu0 0.0
    %171 = vmatpush.msra.mxu0 0.0
    %172 = vmatpush.msra.mxu0 0.0
    %173 = vmatpush.msra.mxu0 0.0
    %174 = vmatpush.msra.mxu0 0.0
    %175 = vmatpush.msra.mxu0 0.0
    %176 = vmatpush.msra.mxu0 0.0
    %177 = vmatpush.msra.mxu0 0.0
    %178 = vmatpush.msra.mxu0 0.0
    %179 = vmatpush.msra.mxu0 0.0
    %180 = vmatpush.msra.mxu0 %v156
    %181 = vmatpush.msra.mxu0 %v155
    %182 = vmatpush.msra.mxu0 %v154
    %183 = vmatpush.msra.mxu0 %v153
    %184 = vmatmul.f32.gmra.mxu0 %v163
    %v185 = vpop.f32.mrf.mxu0
    %v186 = vadd.f32 %v159, %v185
    %187 = vmatmul.f32.gmra.mxu0 %v166
    %v188 = vpop.f32.mrf.mxu0
    %v189 = vadd.f32 %v159, %v188
    %190 = vdwg.mxu0
    %v191 = vmax.f32 %v186, 0.0
    %v192 = vmax.f32 %v189, 0.0
    %v193 = vld [vmem:[%s12] sm:$0xff]
    %v194 = vld [vmem:[%s12 + $0x8] sm:$0xff]
    %v195 = vld [vmem:[#allocation2] sm:$0x1]
    %v197 = vperm.slane %v195, 0
    %201 = vrot.lane.b32.xlu0 %v191, 96
    %v202 = vpop.permute.xlu0 %201
    %203 = vrot.lane.b32.xlu0 %v192, 96
    %v204 = vpop.permute.xlu0 %203
    %vm205 = vcmask 130048
    %v206 = vsel %vm205, %v202, 0
    %v208 = vsel %vm205, %v204, 0
    %210 = vmatpush.msra.mxu0 0.0
    %211 = vmatpush.msra.mxu0 0.0
    %212 = vmatpush.msra.mxu0 0.0
    %213 = vmatpush.msra.mxu0 0.0
    %214 = vmatpush.msra.mxu0 0.0
    %215 = vmatpush.msra.mxu0 0.0
    %216 = vmatpush.msra.mxu0 0.0
    %217 = vmatpush.msra.mxu0 0.0
    %218 = vmatpush.msra.mxu0 0.0
    %219 = vmatpush.msra.mxu0 0.0
    %220 = vmatpush.msra.mxu0 0.0
    %221 = vmatpush.msra.mxu0 0.0
    %222 = vmatpush.msra.mxu0 0.0
    %223 = vmatpush.msra.mxu0 0.0
    %224 = vmatpush.msra.mxu0 %v194
    %225 = vmatpush.msra.mxu0 %v193
    %226 = vmatmul.f32.gmra.mxu0 %v206
    %v227 = vpop.f32.mrf.mxu0
    %v228 = vadd.f32 %v197, %v227
    %229 = vmatmul.f32.gmra.mxu0 %v208
    %v230 = vpop.f32.mrf.mxu0
    %v231 = vadd.f32 %v197, %v230
    %232 = vdwg.mxu0
    %v233 = vxor.u32 %v228, 2147483648
    %v234 = vxor.u32 %v231, 2147483648
    %v235 = vmul.f32 %v233, 1.442695
    %v236 = vpow.pop %v235
    %v237 = vmul.f32 %v234, 1.442695
    %v238 = vpow.pop %v237
    %v239 = vadd.f32 %v236, 1.0
    %v240 = vadd.f32 %v238, 1.0
    %v241 = vrcp.pop %v239
    %v242 = vmul.f32 %v239, %v241
    %v243 = vsub.f32 1.0, %v242
    %v244 = vmul.f32 %v241, %v243
    %v245 = vadd.f32 %v241, %v244
    %vm246 = vweird.f32 %v239
    %vm247 = vweird.f32 %v241
    %vm248 = vmor %vm246, %vm247
    %v249 = vsel %vm248, %v241, %v245
    %v250 = vand.u32 2147483647, %v239
    %vm251 = vcmp.eq.f32.partialorder %v250, 8.507059e+37
    %v252 = vand.u32 %v239, 2147483648
    %v253 = vor.u32 1.1754944e-38, %v252
    %v254 = vsel %vm251, %v253, %v249
    %v255 = vmul.f32 1.0, %v254
    %v256 = vrcp.pop %v240
    %v257 = vmul.f32 %v240, %v256
    %v258 = vsub.f32 1.0, %v257
    %v259 = vmul.f32 %v256, %v258
    %v260 = vadd.f32 %v256, %v259
    %vm261 = vweird.f32 %v240
    %vm262 = vweird.f32 %v256
    %vm263 = vmor %vm261, %vm262
    %v264 = vsel %vm263, %v256, %v260
    %v265 = vand.u32 2147483647, %v240
    %vm266 = vcmp.eq.f32.partialorder %v265, 8.507059e+37
    %v267 = vand.u32 %v240, 2147483648
    %v268 = vor.u32 1.1754944e-38, %v267
    %v269 = vsel %vm266, %v268, %v264
    %v270 = vmul.f32 1.0, %v269
    %v271 = vmul.f32 %v255, 0.1
    %v272 = vmul.f32 %v270, 0.1
    %v273 = vld [vmem:[#allocation9] sm:$0xff]
    %v274 = vld [vmem:[#allocation9 + $0x8] sm:$0xff]
    %v275 = vld [vmem:[#allocation9 + $0x10] sm:$0xff]
    %v276 = vld [vmem:[#allocation9 + $0x18] sm:$0xff]
    %v277 = vld [vmem:[%s7] sm:$0x1]
    %v279 = vperm.slane %v277, 0
    %v282 = vsel %vm161, %v149, 0
    %v285 = vsel %vm161, %v150, 0
    %287 = vmatpush.msra.mxu0 0.0
    %288 = vmatpush.msra.mxu0 0.0
    %289 = vmatpush.msra.mxu0 0.0
    %290 = vmatpush.msra.mxu0 0.0
    %291 = vmatpush.msra.mxu0 0.0
    %292 = vmatpush.msra.mxu0 0.0
    %293 = vmatpush.msra.mxu0 0.0
    %294 = vmatpush.msra.mxu0 0.0
    %295 = vmatpush.msra.mxu0 0.0
    %296 = vmatpush.msra.mxu0 0.0
    %297 = vmatpush.msra.mxu0 0.0
    %298 = vmatpush.msra.mxu0 0.0
    %299 = vmatpush.msra.mxu0 %v276
    %300 = vmatpush.msra.mxu0 %v275
    %301 = vmatpush.msra.mxu0 %v274
    %302 = vmatpush.msra.mxu0 %v273
    %303 = vmatmul.f32.gmra.mxu0 %v282
    %v304 = vpop.f32.mrf.mxu0
    %v305 = vadd.f32 %v279, %v304
    %306 = vmatmul.f32.gmra.mxu0 %v285
    %v307 = vpop.f32.mrf.mxu0
    %v308 = vadd.f32 %v279, %v307
    %309 = vdwg.mxu0
    %v310 = vld [vmem:[#allocation11] sm:$0xff]
    %v311 = vld [vmem:[#allocation11 + $0x8] sm:$0xff]
    %v312 = vld [vmem:[#allocation11 + $0x10] sm:$0xff]
    %v313 = vld [vmem:[#allocation11 + $0x18] sm:$0xff]
    %v314 = vld [vmem:[%s9] sm:$0x1]
    %v316 = vperm.slane %v314, 0
    %v319 = vsel %vm161, %v151, 0
    %v322 = vsel %vm161, %v152, 0
    %324 = vmatpush.msra.mxu0 0.0
    %325 = vmatpush.msra.mxu0 0.0
    %326 = vmatpush.msra.mxu0 0.0
    %327 = vmatpush.msra.mxu0 0.0
    %328 = vmatpush.msra.mxu0 0.0
    %329 = vmatpush.msra.mxu0 0.0
    %330 = vmatpush.msra.mxu0 0.0
    %331 = vmatpush.msra.mxu0 0.0
    %332 = vmatpush.msra.mxu0 0.0
    %333 = vmatpush.msra.mxu0 0.0
    %334 = vmatpush.msra.mxu0 0.0
    %335 = vmatpush.msra.mxu0 0.0
    %336 = vmatpush.msra.mxu0 %v313
    %337 = vmatpush.msra.mxu0 %v312
    %338 = vmatpush.msra.mxu0 %v311
    %339 = vmatpush.msra.mxu0 %v310
    %340 = vmatmul.f32.gmra.mxu0 %v319
    %v341 = vpop.f32.mrf.mxu0
    %v342 = vadd.f32 %v316, %v341
    %343 = vmatmul.f32.gmra.mxu0 %v322
    %v344 = vpop.f32.mrf.mxu0
    %v345 = vadd.f32 %v316, %v344
    %346 = vdwg.mxu0
    %v347 = vld [vmem:[%s3] sm:$0x1]
    %v348 = vld [vmem:[%s3 + $0x1] sm:$0x1]
    %349 = vxpose.xlu0.b32.start [1/16] %v347, 128
    %350 = vxpose.xlu0.b32.cont [2/16] 0.0, 128
    %351 = vxpose.xlu0.b32.cont [3/16] 0.0, 128
    %352 = vxpose.xlu0.b32.cont [4/16] 0.0, 128
    %353 = vxpose.xlu0.b32.cont [5/16] 0.0, 128
    %354 = vxpose.xlu0.b32.cont [6/16] 0.0, 128
    %355 = vxpose.xlu0.b32.cont [7/16] 0.0, 128
    %356 = vxpose.xlu0.b32.cont [8/16] 0.0, 128
    %357 = vxpose.xlu0.b32.cont [9/16] 0.0, 128
    %358 = vxpose.xlu0.b32.cont [10/16] 0.0, 128
    %359 = vxpose.xlu0.b32.cont [11/16] 0.0, 128
    %360 = vxpose.xlu0.b32.cont [12/16] 0.0, 128
    %361 = vxpose.xlu0.b32.cont [13/16] 0.0, 128
    %362 = vxpose.xlu0.b32.cont [14/16] 0.0, 128
    %363 = vxpose.xlu0.b32.cont [15/16] 0.0, 128
    %364 = vxpose.xlu0.b32.end [16/16] 0.0, 128
    %v365 = vpop.trf.xlu0
    %v366 = vpop.trf.xlu0
    %v367 = vpop.trf.xlu0
    %v368 = vpop.trf.xlu0
    %v369 = vpop.trf.xlu0
    %v370 = vpop.trf.xlu0
    %v371 = vpop.trf.xlu0
    %v372 = vpop.trf.xlu0
    %v373 = vpop.trf.xlu0
    %v374 = vpop.trf.xlu0
    %v375 = vpop.trf.xlu0
    %v376 = vpop.trf.xlu0
    %v377 = vpop.trf.xlu0
    %v378 = vpop.trf.xlu0
    %v379 = vpop.trf.xlu0
    %v380 = vpop.trf.xlu0
    %v382 = vperm.slane %v347, 0
    %385 = vset.pattern.permute.xlu0 0
    %386 = vperm.xlu0 %385, %v365
    %v387 = vpop.permute.xlu0 %386
    %v389 = vsub.f32 %v382, %v387
    %v390 = vand.u32 2147483647, %v389
    %v391 = vsub.f32 0.0, %v390
    %v392 = vrcp.pop 0.9
    %v393 = vmul.f32 0.9, %v392
    %v394 = vsub.f32 1.0, %v393
    %v395 = vmul.f32 %v392, %v394
    %v396 = vadd.f32 %v392, %v395
    %vm397 = vweird.f32 %v392
    %v398 = vsel %vm397, %v392, %v396
    %v399 = vmul.f32 %v391, %v398
    %v400 = vmul.f32 %v399, 1.442695
    %v401 = vpow.pop %v400
    %v402 = vadd.f32 %v401, 1e-08
    %v403 = vlog2.pop %v402
    %v404 = vmul.f32 %v403, 0.6931472
    %405 = vxpose.xlu0.b32.start [1/16] %v348, 128
    %406 = vxpose.xlu0.b32.cont [2/16] 0.0, 128
    %407 = vxpose.xlu0.b32.cont [3/16] 0.0, 128
    %408 = vxpose.xlu0.b32.cont [4/16] 0.0, 128
    %409 = vxpose.xlu0.b32.cont [5/16] 0.0, 128
    %410 = vxpose.xlu0.b32.cont [6/16] 0.0, 128
    %411 = vxpose.xlu0.b32.cont [7/16] 0.0, 128
    %412 = vxpose.xlu0.b32.cont [8/16] 0.0, 128
    %413 = vxpose.xlu0.b32.cont [9/16] 0.0, 128
    %414 = vxpose.xlu0.b32.cont [10/16] 0.0, 128
    %415 = vxpose.xlu0.b32.cont [11/16] 0.0, 128
    %416 = vxpose.xlu0.b32.cont [12/16] 0.0, 128
    %417 = vxpose.xlu0.b32.cont [13/16] 0.0, 128
    %418 = vxpose.xlu0.b32.cont [14/16] 0.0, 128
    %419 = vxpose.xlu0.b32.cont [15/16] 0.0, 128
    %420 = vxpose.xlu0.b32.end [16/16] 0.0, 128
    %v421 = vpop.trf.xlu0
    %v422 = vpop.trf.xlu0
    %v423 = vpop.trf.xlu0
    %v424 = vpop.trf.xlu0
    %v425 = vpop.trf.xlu0
    %v426 = vpop.trf.xlu0
    %v427 = vpop.trf.xlu0
    %v428 = vpop.trf.xlu0
    %v429 = vpop.trf.xlu0
    %v430 = vpop.trf.xlu0
    %v431 = vpop.trf.xlu0
    %v432 = vpop.trf.xlu0
    %v433 = vpop.trf.xlu0
    %v434 = vpop.trf.xlu0
    %v435 = vpop.trf.xlu0
    %v436 = vpop.trf.xlu0
    %v438 = vperm.slane %v348, 0
    %441 = vset.pattern.permute.xlu0 0
    %442 = vperm.xlu0 %441, %v421
    %v443 = vpop.permute.xlu0 %442
    %v445 = vsub.f32 %v438, %v443
    %v446 = vand.u32 2147483647, %v445
    %v447 = vsub.f32 0.0, %v446
    %v448 = vmul.f32 %v447, %v398
    %v449 = vmul.f32 %v448, 1.442695
    %v450 = vpow.pop %v449
    %v451 = vadd.f32 %v450, 1e-08
    %v452 = vlog2.pop %v451
    %v453 = vmul.f32 %v452, 0.6931472
    %455 = vset.pattern.permute.xlu0 0
    %456 = vperm.xlu0 %455, %v271
    %v457 = vpop.permute.xlu0 %456
    %460 = vset.pattern.permute.xlu0 0
    %461 = vperm.xlu0 %460, %v272
    %v462 = vpop.permute.xlu0 %461
    %v464 = vadd.f32 %v404, %v457
    %v465 = vadd.f32 %v453, %v462
    %vm466 = vcmask 64512
    %v468 = vsel %vm466, %v186, 0
    %v471 = vsel %vm466, %v305, 0
    %473 = vmatpush.xpose.msra.mxu0 0.0
    %474 = vmatpush.xpose.msra.mxu0 0.0
    %475 = vmatpush.xpose.msra.mxu0 0.0
    %476 = vmatpush.xpose.msra.mxu0 0.0
    %477 = vmatpush.xpose.msra.mxu0 0.0
    %478 = vmatpush.xpose.msra.mxu0 0.0
    %479 = vmatpush.xpose.msra.mxu0 0.0
    %480 = vmatpush.xpose.msra.mxu0 0.0
    %481 = vmatpush.xpose.msra.mxu0 0.0
    %482 = vmatpush.xpose.msra.mxu0 0.0
    %483 = vmatpush.xpose.msra.mxu0 0.0
    %484 = vmatpush.xpose.msra.mxu0 0.0
    %485 = vmatpush.xpose.msra.mxu0 0.0
    %486 = vmatpush.xpose.msra.mxu0 0.0
    %487 = vmatpush.xpose.msra.mxu0 0.0
    %488 = vmatpush.xpose.msra.mxu0 %v471
    %489 = vmatmul.f32.gmra.mxu0 %v468
    %v490 = vpop.f32.mrf.mxu0
    %v491 = vadd.f32 %v464, %v490
    %492 = vdwg.mxu0
    %v494 = vsel %vm466, %v189, 0
    %v497 = vsel %vm466, %v308, 0
    %499 = vmatpush.xpose.msra.mxu0 0.0
    %500 = vmatpush.xpose.msra.mxu0 0.0
    %501 = vmatpush.xpose.msra.mxu0 0.0
    %502 = vmatpush.xpose.msra.mxu0 0.0
    %503 = vmatpush.xpose.msra.mxu0 0.0
    %504 = vmatpush.xpose.msra.mxu0 0.0
    %505 = vmatpush.xpose.msra.mxu0 0.0
    %506 = vmatpush.xpose.msra.mxu0 0.0
    %507 = vmatpush.xpose.msra.mxu0 0.0
    %508 = vmatpush.xpose.msra.mxu0 0.0
    %509 = vmatpush.xpose.msra.mxu0 0.0
    %510 = vmatpush.xpose.msra.mxu0 0.0
    %511 = vmatpush.xpose.msra.mxu0 0.0
    %512 = vmatpush.xpose.msra.mxu0 0.0
    %513 = vmatpush.xpose.msra.mxu0 0.0
    %514 = vmatpush.xpose.msra.mxu0 %v497
    %515 = vmatmul.f32.gmra.mxu0 %v494
    %v516 = vpop.f32.mrf.mxu0
    %v517 = vadd.f32 %v465, %v516
    %518 = vdwg.mxu0
    %v519 = vsel %vm466, %v491, -inf
    %520 = vmax.xlane.f32.xlu0 %v519
    %v521 = vpop.xlane.xlu0 %520
    %v522 = vsel %vm466, %v517, -inf
    %523 = vmax.xlane.f32.xlu0 %v522
    %v524 = vpop.xlane.xlu0 %523
    %v525 = vsub.f32 %v491, %v521
    %v526 = vsub.f32 %v517, %v524
    %v527 = vmul.f32 %v525, 1.442695
    %v528 = vpow.pop %v527
    %v529 = vmul.f32 %v526, 1.442695
    %v530 = vpow.pop %v529
    %v531 = vsel %vm466, %v528, 0.0
    %532 = vadd.xlane.f32.xlu0 %v531
    %v533 = vpop.xlane.xlu0 %532
    %v534 = vsel %vm466, %v530, 0.0
    %535 = vadd.xlane.f32.xlu0 %v534
    %v536 = vpop.xlane.xlu0 %535
    %v537 = vrcp.pop %v533
    %v538 = vmul.f32 %v533, %v537
    %v539 = vsub.f32 1.0, %v538
    %v540 = vmul.f32 %v537, %v539
    %v541 = vadd.f32 %v537, %v540
    %vm542 = vweird.f32 %v533
    %vm543 = vweird.f32 %v537
    %vm544 = vmor %vm542, %vm543
    %v545 = vsel %vm544, %v537, %v541
    %v546 = vand.u32 2147483647, %v533
    %vm547 = vcmp.eq.f32.partialorder %v546, 8.507059e+37
    %v548 = vand.u32 %v533, 2147483648
    %v549 = vor.u32 1.1754944e-38, %v548
    %v550 = vsel %vm547, %v549, %v545
    %v551 = vrcp.pop %v536
    %v552 = vmul.f32 %v536, %v551
    %v553 = vsub.f32 1.0, %v552
    %v554 = vmul.f32 %v551, %v553
    %v555 = vadd.f32 %v551, %v554
    %vm556 = vweird.f32 %v536
    %vm557 = vweird.f32 %v551
    %vm558 = vmor %vm556, %vm557
    %v559 = vsel %vm558, %v551, %v555
    %v560 = vand.u32 2147483647, %v536
    %vm561 = vcmp.eq.f32.partialorder %v560, 8.507059e+37
    %v562 = vand.u32 %v536, 2147483648
    %v563 = vor.u32 1.1754944e-38, %v562
    %v564 = vsel %vm561, %v563, %v559
    %v565 = vmul.f32 %v528, %v550
    %v566 = vmul.f32 %v530, %v564
    %v568 = vsel %vm466, %v565, 0
    %570 = vmatpush.msra.mxu0 0.0
    %571 = vmatpush.msra.mxu0 0.0
    %572 = vmatpush.msra.mxu0 0.0
    %573 = vmatpush.msra.mxu0 0.0
    %574 = vmatpush.msra.mxu0 0.0
    %575 = vmatpush.msra.mxu0 0.0
    %576 = vmatpush.msra.mxu0 0.0
    %577 = vmatpush.msra.mxu0 0.0
    %578 = vmatpush.msra.mxu0 0.0
    %579 = vmatpush.msra.mxu0 0.0
    %580 = vmatpush.msra.mxu0 0.0
    %581 = vmatpush.msra.mxu0 0.0
    %582 = vmatpush.msra.mxu0 0.0
    %583 = vmatpush.msra.mxu0 0.0
    %584 = vmatpush.msra.mxu0 0.0
    %585 = vmatpush.msra.mxu0 %v342
    %586 = vmatmul.f32.gmra.mxu0 %v568
    %v587 = vpop.f32.mrf.mxu0
    %v588 = vadd.f32 0.0, %v587
    %589 = vdwg.mxu0
    %v591 = vsel %vm466, %v566, 0
    %593 = vmatpush.msra.mxu0 0.0
    %594 = vmatpush.msra.mxu0 0.0
    %595 = vmatpush.msra.mxu0 0.0
    %596 = vmatpush.msra.mxu0 0.0
    %597 = vmatpush.msra.mxu0 0.0
    %598 = vmatpush.msra.mxu0 0.0
    %599 = vmatpush.msra.mxu0 0.0
    %600 = vmatpush.msra.mxu0 0.0
    %601 = vmatpush.msra.mxu0 0.0
    %602 = vmatpush.msra.mxu0 0.0
    %603 = vmatpush.msra.mxu0 0.0
    %604 = vmatpush.msra.mxu0 0.0
    %605 = vmatpush.msra.mxu0 0.0
    %606 = vmatpush.msra.mxu0 0.0
    %607 = vmatpush.msra.mxu0 0.0
    %608 = vmatpush.msra.mxu0 %v345
    %609 = vmatmul.f32.gmra.mxu0 %v591
    %v610 = vpop.f32.mrf.mxu0
    %v611 = vadd.f32 0.0, %v610
    %612 = vdwg.mxu0
    %613 = vrot.lane.b32.xlu0 %v186, 120
    %v614 = vpop.permute.xlu0 %613
    %615 = vrot.lane.b32.xlu0 %v305, 120
    %v616 = vpop.permute.xlu0 %615
    %v617 = vsel %vm466, %v614, 0
    %v619 = vsel %vm466, %v616, 0
    %621 = vmatpush.xpose.msra.mxu0 0.0
    %622 = vmatpush.xpose.msra.mxu0 0.0
    %623 = vmatpush.xpose.msra.mxu0 0.0
    %624 = vmatpush.xpose.msra.mxu0 0.0
    %625 = vmatpush.xpose.msra.mxu0 0.0
    %626 = vmatpush.xpose.msra.mxu0 0.0
    %627 = vmatpush.xpose.msra.mxu0 0.0
    %628 = vmatpush.xpose.msra.mxu0 0.0
    %629 = vmatpush.xpose.msra.mxu0 0.0
    %630 = vmatpush.xpose.msra.mxu0 0.0
    %631 = vmatpush.xpose.msra.mxu0 0.0
    %632 = vmatpush.xpose.msra.mxu0 0.0
    %633 = vmatpush.xpose.msra.mxu0 0.0
    %634 = vmatpush.xpose.msra.mxu0 0.0
    %635 = vmatpush.xpose.msra.mxu0 0.0
    %636 = vmatpush.xpose.msra.mxu0 %v619
    %637 = vmatmul.f32.gmra.mxu0 %v617
    %v638 = vpop.f32.mrf.mxu0
    %v639 = vadd.f32 %v464, %v638
    %640 = vdwg.mxu0
    %641 = vrot.lane.b32.xlu0 %v189, 120
    %v642 = vpop.permute.xlu0 %641
    %643 = vrot.lane.b32.xlu0 %v308, 120
    %v644 = vpop.permute.xlu0 %643
    %v645 = vsel %vm466, %v642, 0
    %v647 = vsel %vm466, %v644, 0
    %649 = vmatpush.xpose.msra.mxu0 0.0
    %650 = vmatpush.xpose.msra.mxu0 0.0
    %651 = vmatpush.xpose.msra.mxu0 0.0
    %652 = vmatpush.xpose.msra.mxu0 0.0
    %653 = vmatpush.xpose.msra.mxu0 0.0
    %654 = vmatpush.xpose.msra.mxu0 0.0
    %655 = vmatpush.xpose.msra.mxu0 0.0
    %656 = vmatpush.xpose.msra.mxu0 0.0
    %657 = vmatpush.xpose.msra.mxu0 0.0
    %658 = vmatpush.xpose.msra.mxu0 0.0
    %659 = vmatpush.xpose.msra.mxu0 0.0
    %660 = vmatpush.xpose.msra.mxu0 0.0
    %661 = vmatpush.xpose.msra.mxu0 0.0
    %662 = vmatpush.xpose.msra.mxu0 0.0
    %663 = vmatpush.xpose.msra.mxu0 0.0
    %664 = vmatpush.xpose.msra.mxu0 %v647
    %665 = vmatmul.f32.gmra.mxu0 %v645
    %v666 = vpop.f32.mrf.mxu0
    %v667 = vadd.f32 %v465, %v666
    %668 = vdwg.mxu0
    %v669 = vsel %vm466, %v639, -inf
    %670 = vmax.xlane.f32.xlu0 %v669
    %v671 = vpop.xlane.xlu0 %670
    %v672 = vsel %vm466, %v667, -inf
    %673 = vmax.xlane.f32.xlu0 %v672
    %v674 = vpop.xlane.xlu0 %673
    %v675 = vsub.f32 %v639, %v671
    %v676 = vsub.f32 %v667, %v674
    %v677 = vmul.f32 %v675, 1.442695
    %v678 = vpow.pop %v677
    %v679 = vmul.f32 %v676, 1.442695
    %v680 = vpow.pop %v679
    %v681 = vsel %vm466, %v678, 0.0
    %682 = vadd.xlane.f32.xlu0 %v681
    %v683 = vpop.xlane.xlu0 %682
    %v684 = vsel %vm466, %v680, 0.0
    %685 = vadd.xlane.f32.xlu0 %v684
    %v686 = vpop.xlane.xlu0 %685
    %v687 = vrcp.pop %v683
    %v688 = vmul.f32 %v683, %v687
    %v689 = vsub.f32 1.0, %v688
    %v690 = vmul.f32 %v687, %v689
    %v691 = vadd.f32 %v687, %v690
    %vm692 = vweird.f32 %v683
    %vm693 = vweird.f32 %v687
    %vm694 = vmor %vm692, %vm693
    %v695 = vsel %vm694, %v687, %v691
    %v696 = vand.u32 2147483647, %v683
    %vm697 = vcmp.eq.f32.partialorder %v696, 8.507059e+37
    %v698 = vand.u32 %v683, 2147483648
    %v699 = vor.u32 1.1754944e-38, %v698
    %v700 = vsel %vm697, %v699, %v695
    %v701 = vrcp.pop %v686
    %v702 = vmul.f32 %v686, %v701
    %v703 = vsub.f32 1.0, %v702
    %v704 = vmul.f32 %v701, %v703
    %v705 = vadd.f32 %v701, %v704
    %vm706 = vweird.f32 %v686
    %vm707 = vweird.f32 %v701
    %vm708 = vmor %vm706, %vm707
    %v709 = vsel %vm708, %v701, %v705
    %v710 = vand.u32 2147483647, %v686
    %vm711 = vcmp.eq.f32.partialorder %v710, 8.507059e+37
    %v712 = vand.u32 %v686, 2147483648
    %v713 = vor.u32 1.1754944e-38, %v712
    %v714 = vsel %vm711, %v713, %v709
    %v715 = vmul.f32 %v678, %v700
    %v716 = vmul.f32 %v680, %v714
    %718 = vrot.lane.b32.xlu0 %v342, 120
    %v719 = vpop.permute.xlu0 %718
    %v722 = vsel %vm466, %v715, 0
    %724 = vmatpush.msra.mxu0 0.0
    %725 = vmatpush.msra.mxu0 0.0
    %726 = vmatpush.msra.mxu0 0.0
    %727 = vmatpush.msra.mxu0 0.0
    %728 = vmatpush.msra.mxu0 0.0
    %729 = vmatpush.msra.mxu0 0.0
    %730 = vmatpush.msra.mxu0 0.0
    %731 = vmatpush.msra.mxu0 0.0
    %732 = vmatpush.msra.mxu0 0.0
    %733 = vmatpush.msra.mxu0 0.0
    %734 = vmatpush.msra.mxu0 0.0
    %735 = vmatpush.msra.mxu0 0.0
    %736 = vmatpush.msra.mxu0 0.0
    %737 = vmatpush.msra.mxu0 0.0
    %738 = vmatpush.msra.mxu0 0.0
    %739 = vmatpush.msra.mxu0 %v719
    %740 = vmatmul.f32.gmra.mxu0 %v722
    %v741 = vpop.f32.mrf.mxu0
    %v742 = vadd.f32 0.0, %v741
    %743 = vdwg.mxu0
    %745 = vrot.lane.b32.xlu0 %v345, 120
    %v746 = vpop.permute.xlu0 %745
    %v749 = vsel %vm466, %v716, 0
    %751 = vmatpush.msra.mxu0 0.0
    %752 = vmatpush.msra.mxu0 0.0
    %753 = vmatpush.msra.mxu0 0.0
    %754 = vmatpush.msra.mxu0 0.0
    %755 = vmatpush.msra.mxu0 0.0
    %756 = vmatpush.msra.mxu0 0.0
    %757 = vmatpush.msra.mxu0 0.0
    %758 = vmatpush.msra.mxu0 0.0
    %759 = vmatpush.msra.mxu0 0.0
    %760 = vmatpush.msra.mxu0 0.0
    %761 = vmatpush.msra.mxu0 0.0
    %762 = vmatpush.msra.mxu0 0.0
    %763 = vmatpush.msra.mxu0 0.0
    %764 = vmatpush.msra.mxu0 0.0
    %765 = vmatpush.msra.mxu0 0.0
    %766 = vmatpush.msra.mxu0 %v746
    %767 = vmatmul.f32.gmra.mxu0 %v749
    %v768 = vpop.f32.mrf.mxu0
    %v769 = vadd.f32 0.0, %v768
    %770 = vdwg.mxu0
    %771 = vrot.lane.b32.xlu0 %v186, 112
    %v772 = vpop.permute.xlu0 %771
    %773 = vrot.lane.b32.xlu0 %v305, 112
    %v774 = vpop.permute.xlu0 %773
    %v775 = vsel %vm466, %v772, 0
    %v777 = vsel %vm466, %v774, 0
    %779 = vmatpush.xpose.msra.mxu0 0.0
    %780 = vmatpush.xpose.msra.mxu0 0.0
    %781 = vmatpush.xpose.msra.mxu0 0.0
    %782 = vmatpush.xpose.msra.mxu0 0.0
    %783 = vmatpush.xpose.msra.mxu0 0.0
    %784 = vmatpush.xpose.msra.mxu0 0.0
    %785 = vmatpush.xpose.msra.mxu0 0.0
    %786 = vmatpush.xpose.msra.mxu0 0.0
    %787 = vmatpush.xpose.msra.mxu0 0.0
    %788 = vmatpush.xpose.msra.mxu0 0.0
    %789 = vmatpush.xpose.msra.mxu0 0.0
    %790 = vmatpush.xpose.msra.mxu0 0.0
    %791 = vmatpush.xpose.msra.mxu0 0.0
    %792 = vmatpush.xpose.msra.mxu0 0.0
    %793 = vmatpush.xpose.msra.mxu0 0.0
    %794 = vmatpush.xpose.msra.mxu0 %v777
    %795 = vmatmul.f32.gmra.mxu0 %v775
    %v796 = vpop.f32.mrf.mxu0
    %v797 = vadd.f32 %v464, %v796
    %798 = vdwg.mxu0
    %799 = vrot.lane.b32.xlu0 %v189, 112
    %v800 = vpop.permute.xlu0 %799
    %801 = vrot.lane.b32.xlu0 %v308, 112
    %v802 = vpop.permute.xlu0 %801
    %v803 = vsel %vm466, %v800, 0
    %v805 = vsel %vm466, %v802, 0
    %807 = vmatpush.xpose.msra.mxu0 0.0
    %808 = vmatpush.xpose.msra.mxu0 0.0
    %809 = vmatpush.xpose.msra.mxu0 0.0
    %810 = vmatpush.xpose.msra.mxu0 0.0
    %811 = vmatpush.xpose.msra.mxu0 0.0
    %812 = vmatpush.xpose.msra.mxu0 0.0
    %813 = vmatpush.xpose.msra.mxu0 0.0
    %814 = vmatpush.xpose.msra.mxu0 0.0
    %815 = vmatpush.xpose.msra.mxu0 0.0
    %816 = vmatpush.xpose.msra.mxu0 0.0
    %817 = vmatpush.xpose.msra.mxu0 0.0
    %818 = vmatpush.xpose.msra.mxu0 0.0
    %819 = vmatpush.xpose.msra.mxu0 0.0
    %820 = vmatpush.xpose.msra.mxu0 0.0
    %821 = vmatpush.xpose.msra.mxu0 0.0
    %822 = vmatpush.xpose.msra.mxu0 %v805
    %823 = vmatmul.f32.gmra.mxu0 %v803
    %v824 = vpop.f32.mrf.mxu0
    %v825 = vadd.f32 %v465, %v824
    %826 = vdwg.mxu0
    %v827 = vsel %vm466, %v797, -inf
    %828 = vmax.xlane.f32.xlu0 %v827
    %v829 = vpop.xlane.xlu0 %828
    %v830 = vsel %vm466, %v825, -inf
    %831 = vmax.xlane.f32.xlu0 %v830
    %v832 = vpop.xlane.xlu0 %831
    %v833 = vsub.f32 %v797, %v829
    %v834 = vsub.f32 %v825, %v832
    %v835 = vmul.f32 %v833, 1.442695
    %v836 = vpow.pop %v835
    %v837 = vmul.f32 %v834, 1.442695
    %v838 = vpow.pop %v837
    %v839 = vsel %vm466, %v836, 0.0
    %840 = vadd.xlane.f32.xlu0 %v839
    %v841 = vpop.xlane.xlu0 %840
    %v842 = vsel %vm466, %v838, 0.0
    %843 = vadd.xlane.f32.xlu0 %v842
    %v844 = vpop.xlane.xlu0 %843
    %v845 = vrcp.pop %v841
    %v846 = vmul.f32 %v841, %v845
    %v847 = vsub.f32 1.0, %v846
    %v848 = vmul.f32 %v845, %v847
    %v849 = vadd.f32 %v845, %v848
    %vm850 = vweird.f32 %v841
    %vm851 = vweird.f32 %v845
    %vm852 = vmor %vm850, %vm851
    %v853 = vsel %vm852, %v845, %v849
    %v854 = vand.u32 2147483647, %v841
    %vm855 = vcmp.eq.f32.partialorder %v854, 8.507059e+37
    %v856 = vand.u32 %v841, 2147483648
    %v857 = vor.u32 1.1754944e-38, %v856
    %v858 = vsel %vm855, %v857, %v853
    %v859 = vrcp.pop %v844
    %v860 = vmul.f32 %v844, %v859
    %v861 = vsub.f32 1.0, %v860
    %v862 = vmul.f32 %v859, %v861
    %v863 = vadd.f32 %v859, %v862
    %vm864 = vweird.f32 %v844
    %vm865 = vweird.f32 %v859
    %vm866 = vmor %vm864, %vm865
    %v867 = vsel %vm866, %v859, %v863
    %v868 = vand.u32 2147483647, %v844
    %vm869 = vcmp.eq.f32.partialorder %v868, 8.507059e+37
    %v870 = vand.u32 %v844, 2147483648
    %v871 = vor.u32 1.1754944e-38, %v870
    %v872 = vsel %vm869, %v871, %v867
    %v873 = vmul.f32 %v836, %v858
    %v874 = vmul.f32 %v838, %v872
    %875 = vrot.lane.b32.xlu0 %v342, 112
    %v876 = vpop.permute.xlu0 %875
    %v879 = vsel %vm466, %v873, 0
    %881 = vmatpush.msra.mxu0 0.0
    %882 = vmatpush.msra.mxu0 0.0
    %883 = vmatpush.msra.mxu0 0.0
    %884 = vmatpush.msra.mxu0 0.0
    %885 = vmatpush.msra.mxu0 0.0
    %886 = vmatpush.msra.mxu0 0.0
    %887 = vmatpush.msra.mxu0 0.0
    %888 = vmatpush.msra.mxu0 0.0
    %889 = vmatpush.msra.mxu0 0.0
    %890 = vmatpush.msra.mxu0 0.0
    %891 = vmatpush.msra.mxu0 0.0
    %892 = vmatpush.msra.mxu0 0.0
    %893 = vmatpush.msra.mxu0 0.0
    %894 = vmatpush.msra.mxu0 0.0
    %895 = vmatpush.msra.mxu0 0.0
    %896 = vmatpush.msra.mxu0 %v876
    %897 = vmatmul.f32.gmra.mxu0 %v879
    %v898 = vpop.f32.mrf.mxu0
    %v899 = vadd.f32 0.0, %v898
    %900 = vdwg.mxu0
    %901 = vrot.lane.b32.xlu0 %v345, 112
    %v902 = vpop.permute.xlu0 %901
    %v905 = vsel %vm466, %v874, 0
    %907 = vmatpush.msra.mxu0 0.0
    %908 = vmatpush.msra.mxu0 0.0
    %909 = vmatpush.msra.mxu0 0.0
    %910 = vmatpush.msra.mxu0 0.0
    %911 = vmatpush.msra.mxu0 0.0
    %912 = vmatpush.msra.mxu0 0.0
    %913 = vmatpush.msra.mxu0 0.0
    %914 = vmatpush.msra.mxu0 0.0
    %915 = vmatpush.msra.mxu0 0.0
    %916 = vmatpush.msra.mxu0 0.0
    %917 = vmatpush.msra.mxu0 0.0
    %918 = vmatpush.msra.mxu0 0.0
    %919 = vmatpush.msra.mxu0 0.0
    %920 = vmatpush.msra.mxu0 0.0
    %921 = vmatpush.msra.mxu0 0.0
    %922 = vmatpush.msra.mxu0 %v902
    %923 = vmatmul.f32.gmra.mxu0 %v905
    %v924 = vpop.f32.mrf.mxu0
    %v925 = vadd.f32 0.0, %v924
    %926 = vdwg.mxu0
    %927 = vrot.lane.b32.xlu0 %v186, 104
    %v928 = vpop.permute.xlu0 %927
    %929 = vrot.lane.b32.xlu0 %v305, 104
    %v930 = vpop.permute.xlu0 %929
    %v931 = vsel %vm466, %v928, 0
    %v933 = vsel %vm466, %v930, 0
    %935 = vmatpush.xpose.msra.mxu0 0.0
    %936 = vmatpush.xpose.msra.mxu0 0.0
    %937 = vmatpush.xpose.msra.mxu0 0.0
    %938 = vmatpush.xpose.msra.mxu0 0.0
    %939 = vmatpush.xpose.msra.mxu0 0.0
    %940 = vmatpush.xpose.msra.mxu0 0.0
    %941 = vmatpush.xpose.msra.mxu0 0.0
    %942 = vmatpush.xpose.msra.mxu0 0.0
    %943 = vmatpush.xpose.msra.mxu0 0.0
    %944 = vmatpush.xpose.msra.mxu0 0.0
    %945 = vmatpush.xpose.msra.mxu0 0.0
    %946 = vmatpush.xpose.msra.mxu0 0.0
    %947 = vmatpush.xpose.msra.mxu0 0.0
    %948 = vmatpush.xpose.msra.mxu0 0.0
    %949 = vmatpush.xpose.msra.mxu0 0.0
    %950 = vmatpush.xpose.msra.mxu0 %v933
    %951 = vmatmul.f32.gmra.mxu0 %v931
    %v952 = vpop.f32.mrf.mxu0
    %v953 = vadd.f32 %v464, %v952
    %954 = vdwg.mxu0
    %955 = vrot.lane.b32.xlu0 %v189, 104
    %v956 = vpop.permute.xlu0 %955
    %957 = vrot.lane.b32.xlu0 %v308, 104
    %v958 = vpop.permute.xlu0 %957
    %v959 = vsel %vm466, %v956, 0
    %v961 = vsel %vm466, %v958, 0
    %963 = vmatpush.xpose.msra.mxu0 0.0
    %964 = vmatpush.xpose.msra.mxu0 0.0
    %965 = vmatpush.xpose.msra.mxu0 0.0
    %966 = vmatpush.xpose.msra.mxu0 0.0
    %967 = vmatpush.xpose.msra.mxu0 0.0
    %968 = vmatpush.xpose.msra.mxu0 0.0
    %969 = vmatpush.xpose.msra.mxu0 0.0
    %970 = vmatpush.xpose.msra.mxu0 0.0
    %971 = vmatpush.xpose.msra.mxu0 0.0
    %972 = vmatpush.xpose.msra.mxu0 0.0
    %973 = vmatpush.xpose.msra.mxu0 0.0
    %974 = vmatpush.xpose.msra.mxu0 0.0
    %975 = vmatpush.xpose.msra.mxu0 0.0
    %976 = vmatpush.xpose.msra.mxu0 0.0
    %977 = vmatpush.xpose.msra.mxu0 0.0
    %978 = vmatpush.xpose.msra.mxu0 %v961
    %979 = vmatmul.f32.gmra.mxu0 %v959
    %v980 = vpop.f32.mrf.mxu0
    %v981 = vadd.f32 %v465, %v980
    %982 = vdwg.mxu0
    %v983 = vsel %vm466, %v953, -inf
    %984 = vmax.xlane.f32.xlu0 %v983
    %v985 = vpop.xlane.xlu0 %984
    %v986 = vsel %vm466, %v981, -inf
    %987 = vmax.xlane.f32.xlu0 %v986
    %v988 = vpop.xlane.xlu0 %987
    %v989 = vsub.f32 %v953, %v985
    %v990 = vsub.f32 %v981, %v988
    %v991 = vmul.f32 %v989, 1.442695
    %v992 = vpow.pop %v991
    %v993 = vmul.f32 %v990, 1.442695
    %v994 = vpow.pop %v993
    %v995 = vsel %vm466, %v992, 0.0
    %996 = vadd.xlane.f32.xlu0 %v995
    %v997 = vpop.xlane.xlu0 %996
    %v998 = vsel %vm466, %v994, 0.0
    %999 = vadd.xlane.f32.xlu0 %v998
    %v1000 = vpop.xlane.xlu0 %999
    %v1001 = vrcp.pop %v997
    %v1002 = vmul.f32 %v997, %v1001
    %v1003 = vsub.f32 1.0, %v1002
    %v1004 = vmul.f32 %v1001, %v1003
    %v1005 = vadd.f32 %v1001, %v1004
    %vm1006 = vweird.f32 %v997
    %vm1007 = vweird.f32 %v1001
    %vm1008 = vmor %vm1006, %vm1007
    %v1009 = vsel %vm1008, %v1001, %v1005
    %v1010 = vand.u32 2147483647, %v997
    %vm1011 = vcmp.eq.f32.partialorder %v1010, 8.507059e+37
    %v1012 = vand.u32 %v997, 2147483648
    %v1013 = vor.u32 1.1754944e-38, %v1012
    %v1014 = vsel %vm1011, %v1013, %v1009
    %v1015 = vrcp.pop %v1000
    %v1016 = vmul.f32 %v1000, %v1015
    %v1017 = vsub.f32 1.0, %v1016
    %v1018 = vmul.f32 %v1015, %v1017
    %v1019 = vadd.f32 %v1015, %v1018
    %vm1020 = vweird.f32 %v1000
    %vm1021 = vweird.f32 %v1015
    %vm1022 = vmor %vm1020, %vm1021
    %v1023 = vsel %vm1022, %v1015, %v1019
    %v1024 = vand.u32 2147483647, %v1000
    %vm1025 = vcmp.eq.f32.partialorder %v1024, 8.507059e+37
    %v1026 = vand.u32 %v1000, 2147483648
    %v1027 = vor.u32 1.1754944e-38, %v1026
    %v1028 = vsel %vm1025, %v1027, %v1023
    %v1029 = vmul.f32 %v992, %v1014
    %v1030 = vmul.f32 %v994, %v1028
    %1031 = vrot.lane.b32.xlu0 %v342, 104
    %v1032 = vpop.permute.xlu0 %1031
    %v1035 = vsel %vm466, %v1029, 0
    %1037 = vmatpush.msra.mxu0 0.0
    %1038 = vmatpush.msra.mxu0 0.0
    %1039 = vmatpush.msra.mxu0 0.0
    %1040 = vmatpush.msra.mxu0 0.0
    %1041 = vmatpush.msra.mxu0 0.0
    %1042 = vmatpush.msra.mxu0 0.0
    %1043 = vmatpush.msra.mxu0 0.0
    %1044 = vmatpush.msra.mxu0 0.0
    %1045 = vmatpush.msra.mxu0 0.0
    %1046 = vmatpush.msra.mxu0 0.0
    %1047 = vmatpush.msra.mxu0 0.0
    %1048 = vmatpush.msra.mxu0 0.0
    %1049 = vmatpush.msra.mxu0 0.0
    %1050 = vmatpush.msra.mxu0 0.0
    %1051 = vmatpush.msra.mxu0 0.0
    %1052 = vmatpush.msra.mxu0 %v1032
    %1053 = vmatmul.f32.gmra.mxu0 %v1035
    %v1054 = vpop.f32.mrf.mxu0
    %v1055 = vadd.f32 0.0, %v1054
    %1056 = vdwg.mxu0
    %1057 = vrot.lane.b32.xlu0 %v345, 104
    %v1058 = vpop.permute.xlu0 %1057
    %v1061 = vsel %vm466, %v1030, 0
    %1063 = vmatpush.msra.mxu0 0.0
    %1064 = vmatpush.msra.mxu0 0.0
    %1065 = vmatpush.msra.mxu0 0.0
    %1066 = vmatpush.msra.mxu0 0.0
    %1067 = vmatpush.msra.mxu0 0.0
    %1068 = vmatpush.msra.mxu0 0.0
    %1069 = vmatpush.msra.mxu0 0.0
    %1070 = vmatpush.msra.mxu0 0.0
    %1071 = vmatpush.msra.mxu0 0.0
    %1072 = vmatpush.msra.mxu0 0.0
    %1073 = vmatpush.msra.mxu0 0.0
    %1074 = vmatpush.msra.mxu0 0.0
    %1075 = vmatpush.msra.mxu0 0.0
    %1076 = vmatpush.msra.mxu0 0.0
    %1077 = vmatpush.msra.mxu0 0.0
    %1078 = vmatpush.msra.mxu0 %v1058
    %1079 = vmatmul.f32.gmra.mxu0 %v1061
    %v1080 = vpop.f32.mrf.mxu0
    %v1081 = vadd.f32 0.0, %v1080
    %1082 = vdwg.mxu0
    %1085 = vrot.lane.b32.xlu0 %v742, 8
    %v1086 = vpop.permute.xlu0 %1085
    %1087 = vrot.lane.b32.xlu0 %v769, 8
    %v1088 = vpop.permute.xlu0 %1087
    %1093 = vrot.lane.b32.xlu0 %v899, 16
    %v1094 = vpop.permute.xlu0 %1093
    %1095 = vrot.lane.b32.xlu0 %v925, 16
    %v1096 = vpop.permute.xlu0 %1095
    %1101 = vrot.lane.b32.xlu0 %v1055, 24
    %v1102 = vpop.permute.xlu0 %1101
    %1103 = vrot.lane.b32.xlu0 %v1081, 24
    %v1104 = vpop.permute.xlu0 %1103
    %v1107 = vsel %vm466, %v588, %v1086
    %v1108 = vsel %vm466, %v611, %v1088
    %v1109 = vsel %vm205, %v1107, %v1094
    %v1110 = vsel %vm205, %v1108, %v1096
    %vm1111 = vcmask 195584
    %v1112 = vsel %vm1111, %v1109, %v1102
    %v1113 = vsel %vm1111, %v1110, %v1104
    %v1114 = vld [vmem:[#allocation12] sm:$0xff]
    %v1115 = vld [vmem:[#allocation12 + $0x8] sm:$0xff]
    %v1116 = vld [vmem:[#allocation12 + $0x10] sm:$0xff]
    %v1117 = vld [vmem:[#allocation12 + $0x18] sm:$0xff]
    %v1118 = vld [vmem:[%s11] sm:$0x1]
    %v1120 = vperm.slane %v1118, 0
    %v1123 = vsel %vm161, %v1112, 0
    %v1126 = vsel %vm161, %v1113, 0
    %1128 = vmatpush.msra.mxu0 0.0
    %1129 = vmatpush.msra.mxu0 0.0
    %1130 = vmatpush.msra.mxu0 0.0
    %1131 = vmatpush.msra.mxu0 0.0
    %1132 = vmatpush.msra.mxu0 0.0
    %1133 = vmatpush.msra.mxu0 0.0
    %1134 = vmatpush.msra.mxu0 0.0
    %1135 = vmatpush.msra.mxu0 0.0
    %1136 = vmatpush.msra.mxu0 0.0
    %1137 = vmatpush.msra.mxu0 0.0
    %1138 = vmatpush.msra.mxu0 0.0
    %1139 = vmatpush.msra.mxu0 0.0
    %1140 = vmatpush.msra.mxu0 %v1117
    %1141 = vmatpush.msra.mxu0 %v1116
    %1142 = vmatpush.msra.mxu0 %v1115
    %1143 = vmatpush.msra.mxu0 %v1114
    %1144 = vmatmul.f32.gmra.mxu0 %v1123
    %v1145 = vpop.f32.mrf.mxu0
    %v1146 = vadd.f32 %v1120, %v1145
    %1147 = vmatmul.f32.gmra.mxu0 %v1126
    %v1148 = vpop.f32.mrf.mxu0
    %v1149 = vadd.f32 %v1120, %v1148
    %1150 = vdwg.mxu0
    %1151 = vst.msk [vmem:[#allocation14] sm:$0xff] %vm161, %v1146
    %1152 = vst.msk [vmem:[#allocation14 + $0x8] sm:$0xff] %vm161, %v1149
    %1153 = vrot.lane.b32.xlu0 %v715, 8
    %v1154 = vpop.permute.xlu0 %1153
    %1155 = vrot.lane.b32.xlu0 %v716, 8
    %v1156 = vpop.permute.xlu0 %1155
    %1159 = vrot.lane.b32.xlu0 %v873, 16
    %v1160 = vpop.permute.xlu0 %1159
    %1161 = vrot.lane.b32.xlu0 %v874, 16
    %v1162 = vpop.permute.xlu0 %1161
    %1165 = vrot.lane.b32.xlu0 %v1029, 24
    %v1166 = vpop.permute.xlu0 %1165
    %1167 = vrot.lane.b32.xlu0 %v1030, 24
    %v1168 = vpop.permute.xlu0 %1167
    %v1171 = vsel %vm466, %v565, %v1154
    %v1172 = vsel %vm466, %v566, %v1156
    %v1173 = vsel %vm205, %v1171, %v1160
    %v1174 = vsel %vm205, %v1172, %v1162
    %v1175 = vsel %vm1111, %v1173, %v1166
    %v1176 = vsel %vm1111, %v1174, %v1168
    %1177 = vst.msk [vmem:[#allocation15] sm:$0xff] %vm161, %v1175
    %1178 = vst.msk [vmem:[#allocation15 + $0x8] sm:$0xff] %vm161, %v1176
    // Predicated region
    $region82: #{tpu_custom_call.1} parent=1 // pred_check
      _
    $region83: #{tpu_custom_call.1} parent=1 // pred_check_branch
      %1180 = sbr.rel (0) target = $region85
    $region84: #{tpu_custom_call.1} parent=1 // pred_region
      %1182 = vsyncadd [#allocation5], 0
      %s1183 = sshll.u32 [#allocation14], 4
      %s1184 = int_to_ptr.vmem [resolvable:$true] %s1183
      %s1185 = sshll.u32 %s14, 4
      %s1186 = int_to_ptr.hbm [resolvable:$true] %s1185
      %1191 = dma.vmem_to_hbm [thread:$0]  %s1184, 256, %s1186, [#allocation5], 128, 128, 8
    $region85: #{tpu_custom_call.1} parent=1 // pred_fallthru
      _
    // Predicated region
    $region86: #{tpu_custom_call.1} parent=1 // pred_check
      _
    $region87: #{tpu_custom_call.1} parent=1 // pred_check_branch
      %1193 = sbr.rel (0) target = $region89
    $region88: #{tpu_custom_call.1} parent=1 // pred_region
      %1195 = vsyncadd [#allocation16], 0
      %s1196 = sshll.u32 [#allocation15], 4
      %s1197 = int_to_ptr.vmem [resolvable:$true] %s1196
      %s1198 = sshll.u32 %s15, 4
      %s1199 = int_to_ptr.hbm [resolvable:$true] %s1198
      %1204 = dma.vmem_to_hbm [thread:$0]  %s1197, 256, %s1199, [#allocation16], 128, 128, 8
    $region89: #{tpu_custom_call.1} parent=1 // pred_fallthru
      _
    // Predicated region
    $region90: #{tpu_custom_call.1} parent=1 // pred_check
      _
    $region91: #{tpu_custom_call.1} parent=1 // pred_check_branch
      %1206 = sbr.rel (0) target = $region93
    $region92: #{tpu_custom_call.1} parent=1 // pred_region
      %1208 = dma.done [#allocation5], 256
    $region93: #{tpu_custom_call.1} parent=1 // pred_fallthru
      _
    // Predicated region
    $region94: #{tpu_custom_call.1} parent=1 // pred_check
      _
    $region95: #{tpu_custom_call.1} parent=1 // pred_check_branch
      %1210 = sbr.rel (0) target = $region97
    $region96: #{tpu_custom_call.1} parent=1 // pred_region
      %1212 = dma.done [#allocation16], 256
    $region97: #{tpu_custom_call.1} parent=1 // pred_fallthru
      _
    %1213 = vsyncpa [#allocation4], 1
    %1214 = vsyncpa [#allocation7], 1
    %1215 = vsyncpa [#allocation10], 1
    %1216 = vsyncpa [#allocation13], 1
    %1217 = vsyncpa [#allocation5], 1
    %1218 = vsyncpa [#allocation16], 1

</llo_original>
